<compile_context>
chip_gen: v7x
topology: tpu7x:2x2x1
jax: 0.10.0
libtpu: 0.0.40
codegen_flags: <defaults>
</compile_context>

<pallas_src>
import jax
import jax.numpy as jnp
from jax.experimental import pallas as pl
from jax.experimental.pallas import tpu as pltpu

D_IN = 784          # raw input features (1*28*28)
K_PAD = 896         # 7 * 128, lane-aligned first-layer K
H = 512             # hidden width
D_OUT = 10          # logits
N_PAD = 128         # lane-dense padded logits width


def _round_up(n, m):
    return ((n + m - 1) // m) * m


def mlp_kernel(x_ref, w1_ref, b1_ref, w2_ref, b2_ref, w3_ref, b3_ref,
               out_ref, feat_ref):
    # x tile: (TB, 896) f32.  Weights are bf16; feed the MXU bf16 inputs and
    # accumulate in f32.  Elementwise (bias, ReLU) stays f32.
    x = x_ref[...]

    # fc1 + ReLU
    h1 = jnp.dot(x.astype(jnp.bfloat16), w1_ref[...],
                 preferred_element_type=jnp.float32)
    h1 = jnp.maximum(h1 + b1_ref[...], 0.0)
    # (dropout: identity in eval mode)

    # fc2 + ReLU
    h2 = jnp.dot(h1.astype(jnp.bfloat16), w2_ref[...],
                 preferred_element_type=jnp.float32)
    h2 = jnp.maximum(h2 + b2_ref[...], 0.0)
    feat_ref[...] = h2
    # (dropout: identity in eval mode)

    # fc3 (lane-dense 128-wide padded output)
    out = jnp.dot(h2.astype(jnp.bfloat16), w3_ref[...],
                  preferred_element_type=jnp.float32)
    out_ref[...] = out + b3_ref[...]


def mlp_forward(x_nchw, prepared, *, tb_max=256):
    """x_nchw: (B, C, H, W) with C*H*W == 784.

    prepared: output of prepare_params().
    Returns (logits (B, 10) f32, feat (B, 512) f32)."""
    B = x_nchw.shape[0]
    w1, b1, w2, b2, w3, b3 = prepared

    x = x_nchw.reshape(B, -1).astype(jnp.float32)      # (B, 784), torch .view

    # Batch tile: sublane-aligned (>=8), capped at tb_max; pad batch to a
    # multiple of the tile so the grid is exact.
    tb = min(tb_max, _round_up(B, 8))
    b_pad = _round_up(B, tb)
    x = jnp.pad(x, ((0, b_pad - B), (0, K_PAD - D_IN)))  # (B_pad, 896)

    grid = (b_pad // tb,)

    def act_spec(n):
        return pl.BlockSpec((tb, n), lambda i: (i, 0))

    def const_spec(shape):
        return pl.BlockSpec(shape, lambda i: (0, 0))

    flops = 2 * b_pad * (K_PAD * H + H * H + H * N_PAD)
    bytes_accessed = (
        x.size * 4
        + (w1.size + w2.size + w3.size) * 2          # bf16 weights
        + (b1.size + b2.size + b3.size) * 4
        + b_pad * H * 4 + b_pad * N_PAD * 4           # feat + logits writeback
    )

    out_pad, feat_pad = pl.pallas_call(
        mlp_kernel,
        grid=grid,
        out_shape=(
            jax.ShapeDtypeStruct((b_pad, N_PAD), jnp.float32),
            jax.ShapeDtypeStruct((b_pad, H), jnp.float32),
        ),
        in_specs=[
            act_spec(K_PAD),                 # x
            const_spec((K_PAD, H)),          # w1 (resident)
            const_spec((1, H)),              # b1
            const_spec((H, H)),              # w2
            const_spec((1, H)),              # b2
            const_spec((H, N_PAD)),          # w3 (padded)
            const_spec((1, N_PAD)),          # b3 (padded)
        ],
        out_specs=(act_spec(N_PAD), act_spec(H)),
        compiler_params=pltpu.CompilerParams(
            dimension_semantics=("parallel",),
            vmem_limit_bytes=32 * 1024 * 1024,
        ),
        cost_estimate=pl.CostEstimate(
            flops=flops, transcendentals=0, bytes_accessed=bytes_accessed),
    )(x, w1, b1, w2, b2, w3, b3)

    return out_pad[:B, :D_OUT], feat_pad[:B]


def init_params(key):
    """Deterministic parameter init mirroring torch Linear shapes.

    torch stores Linear weight as (out, in); here weights are (in, out) so
    the kernel computes x @ W."""
    k1, k2, k3 = jax.random.split(key, 3)

    def linear(k, fan_in, fan_out):
        kw, kb = jax.random.split(k)
        bound = 1.0 / jnp.sqrt(fan_in)
        w = jax.random.uniform(kw, (fan_in, fan_out), jnp.float32, -bound, bound)
        b = jax.random.uniform(kb, (1, fan_out), jnp.float32, -bound, bound)
        return w, b

    w1t, b1 = linear(k1, D_IN, H)
    w2t, b2 = linear(k2, H, H)
    w3t, b3 = linear(k3, H, D_OUT)
    return (w1t, b1, w2t, b2, w3t, b3)


def prepare_params(params):
    """One-time layout prep: pad W1 rows (784->896), pad W3/b3 cols (10->128),
    cast weights to bf16 (biases stay f32)."""
    w1t, b1, w2t, b2, w3t, b3 = params
    w1p = jnp.zeros((K_PAD, H), jnp.float32).at[:D_IN, :].set(w1t)
    w3p = jnp.zeros((H, N_PAD), jnp.float32).at[:, :D_OUT].set(w3t)
    b3p = jnp.zeros((1, N_PAD), jnp.float32).at[:, :D_OUT].set(b3)
    return (w1p.astype(jnp.bfloat16), b1,
            w2t.astype(jnp.bfloat16), b2,
            w3p.astype(jnp.bfloat16), b3p)


def reference_forward(x_nchw, prepared):
    """Pure-JAX reference mirroring the kernel math (bf16 matmul inputs,
    f32 accumulation), for tolerance checking."""
    B = x_nchw.shape[0]
    x = x_nchw.reshape(B, -1).astype(jnp.float32)
    x = jnp.pad(x, ((0, 0), (0, K_PAD - D_IN)))
    w1, b1, w2, b2, w3, b3 = prepared
    h1 = jnp.maximum(
        jnp.dot(x.astype(jnp.bfloat16), w1,
                preferred_element_type=jnp.float32) + b1, 0.0)
    h2 = jnp.maximum(
        jnp.dot(h1.astype(jnp.bfloat16), w2,
                preferred_element_type=jnp.float32) + b2, 0.0)
    out = jnp.dot(h2.astype(jnp.bfloat16), w3,
                  preferred_element_type=jnp.float32) + b3
    return out[:, :D_OUT], h2


if __name__ == "__main__":
    key = jax.random.PRNGKey(0)
    kx, kp = jax.random.split(key)

    # Small batch, MNIST-like input: (B=2, C=1, H=28, W=28) -> 784 features.
    x = jax.random.normal(kx, (2, 1, 28, 28), dtype=jnp.float32)
    params = init_params(kp)
    prepared = prepare_params(params)

    out, feat = mlp_forward(x, prepared)
    out, feat = jax.block_until_ready((out, feat))

    ref_out, ref_feat = reference_forward(x, prepared)
    assert out.shape == (2, 10) and feat.shape == (2, 512)
    assert jnp.allclose(out, ref_out, atol=1e-2, rtol=1e-2)
    assert jnp.allclose(feat, ref_feat, atol=1e-2, rtol=1e-2)

    print("KERNEL_OK")
</pallas_src>

<mosaic_0001>
module attributes {stable_mosaic.version = 11 : i64} {
  func.func @mlp_kernel(%arg0: i32, %arg1: memref<8x896xf32, #tpu.memory_space<vmem>>, %arg2: memref<896x512xbf16, #tpu.memory_space<vmem>>, %arg3: memref<1x512xf32, #tpu.memory_space<vmem>>, %arg4: memref<512x512xbf16, #tpu.memory_space<vmem>>, %arg5: memref<1x512xf32, #tpu.memory_space<vmem>>, %arg6: memref<512x128xbf16, #tpu.memory_space<vmem>>, %arg7: memref<1x128xf32, #tpu.memory_space<vmem>>, %arg8: memref<8x128xf32, #tpu.memory_space<vmem>>, %arg9: memref<8x512xf32, #tpu.memory_space<vmem>>) attributes {dimension_semantics = [#tpu.dimension_semantics<parallel>], iteration_bounds = array<i64: 1>, scalar_prefetch = 0 : i64, scratch_operands = 0 : i64, tpu.core_type = #tpu.core_type<tc>, window_params = [{transform_indices = @transform_0, window_bounds = array<i64: 8, 896>}, {pipeline_mode = #tpu.pipeline_mode<synchronous>, transform_indices = @transform_1, window_bounds = array<i64: 896, 512>}, {pipeline_mode = #tpu.pipeline_mode<synchronous>, transform_indices = @transform_2, window_bounds = array<i64: 1, 512>}, {pipeline_mode = #tpu.pipeline_mode<synchronous>, transform_indices = @transform_3, window_bounds = array<i64: 512, 512>}, {pipeline_mode = #tpu.pipeline_mode<synchronous>, transform_indices = @transform_4, window_bounds = array<i64: 1, 512>}, {pipeline_mode = #tpu.pipeline_mode<synchronous>, transform_indices = @transform_5, window_bounds = array<i64: 512, 128>}, {pipeline_mode = #tpu.pipeline_mode<synchronous>, transform_indices = @transform_6, window_bounds = array<i64: 1, 128>}, {transform_indices = @transform_7, window_bounds = array<i64: 8, 128>}, {transform_indices = @transform_8, window_bounds = array<i64: 8, 512>}]} {
    %c0 = arith.constant 0 : index
    %c0_0 = arith.constant 0 : index
    %0 = vector.load %arg1[%c0, %c0_0] : memref<8x896xf32, #tpu.memory_space<vmem>>, vector<8x896xf32>
    %1 = arith.truncf %0 : vector<8x896xf32> to vector<8x896xbf16>
    %c0_1 = arith.constant 0 : index
    %c0_2 = arith.constant 0 : index
    %2 = vector.load %arg2[%c0_1, %c0_2] : memref<896x512xbf16, #tpu.memory_space<vmem>>, vector<896x512xbf16>
    %cst = arith.constant dense<0.000000e+00> : vector<8x512xf32>
    %3 = tpu.matmul %1, %2, %cst {dimension_numbers = #tpu.dot_dimension_numbers<[1], [0], [0], [1], [0, 0, 1, 1], [], []>} : vector<8x896xbf16>, vector<896x512xbf16>, vector<8x512xf32> -> vector<8x512xf32>
    %c0_3 = arith.constant 0 : index
    %c0_4 = arith.constant 0 : index
    %4 = vector.load %arg3[%c0_3, %c0_4] : memref<1x512xf32, #tpu.memory_space<vmem>>, vector<1x512xf32>
    %5 = vector.broadcast %4 : vector<1x512xf32> to vector<8x512xf32>
    %6 = arith.addf %3, %5 : vector<8x512xf32>
    %cst_5 = arith.constant 0.000000e+00 : f32
    %7 = vector.broadcast %cst_5 : f32 to vector<8x512xf32>
    %8 = arith.maximumf %6, %7 : vector<8x512xf32>
    %9 = arith.truncf %8 : vector<8x512xf32> to vector<8x512xbf16>
    %c0_6 = arith.constant 0 : index
    %c0_7 = arith.constant 0 : index
    %10 = vector.load %arg4[%c0_6, %c0_7] : memref<512x512xbf16, #tpu.memory_space<vmem>>, vector<512x512xbf16>
    %cst_8 = arith.constant dense<0.000000e+00> : vector<8x512xf32>
    %11 = tpu.matmul %9, %10, %cst_8 {dimension_numbers = #tpu.dot_dimension_numbers<[1], [0], [0], [1], [0, 0, 1, 1], [], []>} : vector<8x512xbf16>, vector<512x512xbf16>, vector<8x512xf32> -> vector<8x512xf32>
    %c0_9 = arith.constant 0 : index
    %c0_10 = arith.constant 0 : index
    %12 = vector.load %arg5[%c0_9, %c0_10] : memref<1x512xf32, #tpu.memory_space<vmem>>, vector<1x512xf32>
    %13 = vector.broadcast %12 : vector<1x512xf32> to vector<8x512xf32>
    %14 = arith.addf %11, %13 : vector<8x512xf32>
    %cst_11 = arith.constant 0.000000e+00 : f32
    %15 = vector.broadcast %cst_11 : f32 to vector<8x512xf32>
    %16 = arith.maximumf %14, %15 : vector<8x512xf32>
    %c0_12 = arith.constant 0 : index
    %c0_13 = arith.constant 0 : index
    %17 = vector.load %arg9[%c0_12, %c0_13] : memref<8x512xf32, #tpu.memory_space<vmem>>, vector<8x512xf32>
    tpu.vector_store %arg9[%c0_12, %c0_13], %16 {strides = array<i32>} : memref<8x512xf32, #tpu.memory_space<vmem>>, vector<8x512xf32>,
    %18 = arith.truncf %16 : vector<8x512xf32> to vector<8x512xbf16>
    %c0_14 = arith.constant 0 : index
    %c0_15 = arith.constant 0 : index
    %19 = vector.load %arg6[%c0_14, %c0_15] : memref<512x128xbf16, #tpu.memory_space<vmem>>, vector<512x128xbf16>
    %cst_16 = arith.constant dense<0.000000e+00> : vector<8x128xf32>
    %20 = tpu.matmul %18, %19, %cst_16 {dimension_numbers = #tpu.dot_dimension_numbers<[1], [0], [0], [1], [0, 0, 1, 1], [], []>} : vector<8x512xbf16>, vector<512x128xbf16>, vector<8x128xf32> -> vector<8x128xf32>
    %c0_17 = arith.constant 0 : index
    %c0_18 = arith.constant 0 : index
    %21 = vector.load %arg7[%c0_17, %c0_18] : memref<1x128xf32, #tpu.memory_space<vmem>>, vector<1x128xf32>
    %22 = vector.broadcast %21 : vector<1x128xf32> to vector<8x128xf32>
    %23 = arith.addf %20, %22 : vector<8x128xf32>
    %c0_19 = arith.constant 0 : index
    %c0_20 = arith.constant 0 : index
    %24 = vector.load %arg8[%c0_19, %c0_20] : memref<8x128xf32, #tpu.memory_space<vmem>>, vector<8x128xf32>
    tpu.vector_store %arg8[%c0_19, %c0_20], %23 {strides = array<i32>} : memref<8x128xf32, #tpu.memory_space<vmem>>, vector<8x128xf32>,
    return
  }
  func.func @transform_0(%arg0: i32) -> (i32, i32) {
    %c0_i32 = arith.constant 0 : i32
    %c0_i32_0 = arith.constant 0 : i32
    return %arg0, %c0_i32 : i32, i32
  }
  func.func @transform_1(%arg0: i32) -> (i32, i32) {
    %c0_i32 = arith.constant 0 : i32
    %c0_i32_0 = arith.constant 0 : i32
    %c0_i32_1 = arith.constant 0 : i32
    return %c0_i32, %c0_i32_0 : i32, i32
  }
  func.func @transform_2(%arg0: i32) -> (i32, i32) {
    %c0_i32 = arith.constant 0 : i32
    %c0_i32_0 = arith.constant 0 : i32
    %c0_i32_1 = arith.constant 0 : i32
    return %c0_i32, %c0_i32_0 : i32, i32
  }
  func.func @transform_3(%arg0: i32) -> (i32, i32) {
    %c0_i32 = arith.constant 0 : i32
    %c0_i32_0 = arith.constant 0 : i32
    %c0_i32_1 = arith.constant 0 : i32
    return %c0_i32, %c0_i32_0 : i32, i32
  }
  func.func @transform_4(%arg0: i32) -> (i32, i32) {
    %c0_i32 = arith.constant 0 : i32
    %c0_i32_0 = arith.constant 0 : i32
    %c0_i32_1 = arith.constant 0 : i32
    return %c0_i32, %c0_i32_0 : i32, i32
  }
  func.func @transform_5(%arg0: i32) -> (i32, i32) {
    %c0_i32 = arith.constant 0 : i32
    %c0_i32_0 = arith.constant 0 : i32
    %c0_i32_1 = arith.constant 0 : i32
    return %c0_i32, %c0_i32_0 : i32, i32
  }
  func.func @transform_6(%arg0: i32) -> (i32, i32) {
    %c0_i32 = arith.constant 0 : i32
    %c0_i32_0 = arith.constant 0 : i32
    %c0_i32_1 = arith.constant 0 : i32
    return %c0_i32, %c0_i32_0 : i32, i32
  }
  func.func @transform_7(%arg0: i32) -> (i32, i32) {
    %c0_i32 = arith.constant 0 : i32
    %c0_i32_0 = arith.constant 0 : i32
    return %arg0, %c0_i32 : i32, i32
  }
  func.func @transform_8(%arg0: i32) -> (i32, i32) {
    %c0_i32 = arith.constant 0 : i32
    %c0_i32_0 = arith.constant 0 : i32
    return %arg0, %c0_i32 : i32, i32
  }
}

</mosaic_0001>

<llo_original>
// kernel: tpu_custom_call.1
$region0: #{tpu_custom_call.1}
  #allocation0 [shape = 'u32[]', space=smem, size = 0x4, offset = 0x4, fixed_abs, tag = 'smem constant byte address 0x4 - core index']
  #allocation1 [shape = 'u32[144,128]{1,0:T(1,128)}', space=vmem, size = 0x12000, scoped, tag = 'internal scratch']
  %s0 = inlined_call_operand.hbm [shape: f32[8,896], index: 0, kind: input, shape index: {}]
  %s1 = inlined_call_operand.hbm [shape: bf16[896,512], index: 1, kind: input, shape index: {}]
  %s2 = inlined_call_operand.vmem [shape: f32[1,512], index: 2, kind: input, shape index: {}]
  %s3 = inlined_call_operand.hbm [shape: bf16[512,512], index: 3, kind: input, shape index: {}]
  %s4 = inlined_call_operand.vmem [shape: f32[1,512], index: 4, kind: input, shape index: {}]
  %s5 = inlined_call_operand.hbm [shape: bf16[512,128], index: 5, kind: input, shape index: {}]
  %s6 = inlined_call_operand.vmem [shape: f32[1,128], index: 6, kind: input, shape index: {}]
  %s7 = inlined_call_operand.hbm [shape: f32[8,128], index: 7, kind: output, shape index: {0}]
  %s8 = inlined_call_operand.hbm [shape: f32[8,512], index: 8, kind: output, shape index: {1}]
  %9 = xla_tuple %s7, %s8
  %s10 = sld [smem:[#allocation0]]
  $region62: #{tpu_custom_call.1} parent=0
    _
  %s12 = ssub.s32 1, %s10
  %s13 = scalar_select 0, %s12, %s10
  $region1: #{tpu_custom_call.1} parent=0
    #allocation2 [shape = 'u8[28672]{0}', space=vmem, size = 0x7000, scoped, tag = 'input window, operand 0, single buffered']
    #allocation3 [shape = 's32[1]{0}', space=sflag, size = 0x4, scoped, tag = 'scoped memory for tpu_custom_call.1']
    #allocation4 [shape = 's32[1]{0}', space=sflag, size = 0x4, scoped, tag = 'scoped memory for tpu_custom_call.1']
    #allocation5 [shape = 'u8[917504]{0}', space=vmem, size = 0xe0000, scoped, tag = 'input window, operand 1, single buffered']
    #allocation6 [shape = 's32[1]{0}', space=sflag, size = 0x4, scoped, tag = 'scoped memory for tpu_custom_call.1']
    #allocation7 [shape = 'u8[524288]{0}', space=vmem, size = 0x80000, scoped, tag = 'input window, operand 3, single buffered']
    #allocation8 [shape = 'u8[131072]{0}', space=vmem, size = 0x20000, scoped, tag = 'input window, operand 5, single buffered']
    #allocation9 [shape = 's32[1]{0}', space=sflag, size = 0x4, scoped, tag = 'scoped memory for tpu_custom_call.1']
    #allocation10 [shape = 'u8[4096]{0}', space=vmem, size = 0x1000, scoped, tag = 'output window, operand 0, single buffered']
    #allocation11 [shape = 'u8[16384]{0}', space=vmem, size = 0x4000, scoped, tag = 'output window, operand 1, single buffered']
    #allocation12 [shape = 's32[1]{0}', space=sflag, size = 0x4, scoped, tag = 'scoped memory for tpu_custom_call.1']
    %14 = vsyncpa [#allocation3], 0
    %15 = vsyncpa [#allocation6], 0
    %16 = vsyncpa [#allocation9], 0
    %17 = vsyncpa [#allocation4], 0
    %18 = vsyncpa [#allocation12], 0
    // Predicated region
    $region2: #{tpu_custom_call.1} parent=1 // pred_check
      _
    $region3: #{tpu_custom_call.1} parent=1 // pred_check_branch
      %20 = sbr.rel (0) target = $region5
    $region4: #{tpu_custom_call.1} parent=1 // pred_region
      %s22 = ssub.s32 896, 896
      %23 = vsyncadd [#allocation3], %s22
      %s25 = sshll.u32 [#allocation2], 4
      %s26 = int_to_ptr.vmem [resolvable:$true] %s25
      %28 = dma.hbm_to_vmem [thread:$0]  %s0, 896, %s26, [#allocation3]
    $region5: #{tpu_custom_call.1} parent=1 // pred_fallthru
      _
    // Predicated region
    $region6: #{tpu_custom_call.1} parent=1 // pred_check
      _
    $region7: #{tpu_custom_call.1} parent=1 // pred_check_branch
      %30 = sbr.rel (0) target = $region9
    $region8: #{tpu_custom_call.1} parent=1 // pred_region
      %s32 = ssub.s32 28672, 28672
      %33 = vsyncadd [#allocation6], %s32
      %s34 = sshll.u32 [#allocation5], 4
      %s35 = int_to_ptr.vmem [resolvable:$true] %s34
      %40 = dma.hbm_to_vmem [thread:$0]  %s1, 28672, %s35, [#allocation6], 256, 256, 16
    $region9: #{tpu_custom_call.1} parent=1 // pred_fallthru
      _
    // Predicated region
    $region10: #{tpu_custom_call.1} parent=1 // pred_check
      _
    $region11: #{tpu_custom_call.1} parent=1 // pred_check_branch
      %42 = sbr.rel (0) target = $region13
    $region12: #{tpu_custom_call.1} parent=1 // pred_region
      _
    $region13: #{tpu_custom_call.1} parent=1 // pred_fallthru
      _
    // Predicated region
    $region14: #{tpu_custom_call.1} parent=1 // pred_check
      _
    $region15: #{tpu_custom_call.1} parent=1 // pred_check_branch
      %44 = sbr.rel (0) target = $region17
    $region16: #{tpu_custom_call.1} parent=1 // pred_region
      %s46 = ssub.s32 16384, 16384
      %47 = vsyncadd [#allocation6], %s46
      %s48 = sshll.u32 [#allocation7], 4
      %s49 = int_to_ptr.vmem [resolvable:$true] %s48
      %54 = dma.hbm_to_vmem [thread:$0]  %s3, 16384, %s49, [#allocation6], 256, 256, 16
    $region17: #{tpu_custom_call.1} parent=1 // pred_fallthru
      _
    // Predicated region
    $region18: #{tpu_custom_call.1} parent=1 // pred_check
      _
    $region19: #{tpu_custom_call.1} parent=1 // pred_check_branch
      %56 = sbr.rel (0) target = $region21
    $region20: #{tpu_custom_call.1} parent=1 // pred_region
      _
    $region21: #{tpu_custom_call.1} parent=1 // pred_fallthru
      _
    // Predicated region
    $region22: #{tpu_custom_call.1} parent=1 // pred_check
      _
    $region23: #{tpu_custom_call.1} parent=1 // pred_check_branch
      %58 = sbr.rel (0) target = $region25
    $region24: #{tpu_custom_call.1} parent=1 // pred_region
      %s60 = ssub.s32 4096, 4096
      %61 = vsyncadd [#allocation9], %s60
      %s62 = sshll.u32 [#allocation8], 4
      %s63 = int_to_ptr.vmem [resolvable:$true] %s62
      %68 = dma.hbm_to_vmem [thread:$0]  %s5, 4096, %s63, [#allocation9], 64, 64, 4
    $region25: #{tpu_custom_call.1} parent=1 // pred_fallthru
      _
    // Predicated region
    $region26: #{tpu_custom_call.1} parent=1 // pred_check
      _
    $region27: #{tpu_custom_call.1} parent=1 // pred_check_branch
      %70 = sbr.rel (0) target = $region29
    $region28: #{tpu_custom_call.1} parent=1 // pred_region
      _
    $region29: #{tpu_custom_call.1} parent=1 // pred_fallthru
      _
    // Predicated region
    $region30: #{tpu_custom_call.1} parent=1 // pred_check
      _
    $region31: #{tpu_custom_call.1} parent=1 // pred_check_branch
      %72 = sbr.rel (0) target = $region33
    $region32: #{tpu_custom_call.1} parent=1 // pred_region
      %73 = dma.done [#allocation3], 896
    $region33: #{tpu_custom_call.1} parent=1 // pred_fallthru
      _
    // Predicated region
    $region34: #{tpu_custom_call.1} parent=1 // pred_check
      _
    $region35: #{tpu_custom_call.1} parent=1 // pred_check_branch
      %75 = sbr.rel (0) target = $region37
    $region36: #{tpu_custom_call.1} parent=1 // pred_region
      %76 = dma.done [#allocation6], 28672
    $region37: #{tpu_custom_call.1} parent=1 // pred_fallthru
      _
    // Predicated region
    $region38: #{tpu_custom_call.1} parent=1 // pred_check
      _
    $region39: #{tpu_custom_call.1} parent=1 // pred_check_branch
      %78 = sbr.rel (0) target = $region41
    $region40: #{tpu_custom_call.1} parent=1 // pred_region
      %79 = dma.done [#allocation6], 16384
    $region41: #{tpu_custom_call.1} parent=1 // pred_fallthru
      _
    // Predicated region
    $region42: #{tpu_custom_call.1} parent=1 // pred_check
      _
    $region43: #{tpu_custom_call.1} parent=1 // pred_check_branch
      %81 = sbr.rel (0) target = $region45
    $region44: #{tpu_custom_call.1} parent=1 // pred_region
      %82 = dma.done [#allocation9], 4096
    $region45: #{tpu_custom_call.1} parent=1 // pred_fallthru
      _
    %v84 = vld [vmem:[#allocation2] sm:$0xff]
    %v85 = vld [vmem:[#allocation2 + $0x8] sm:$0xff]
    %v86 = vld [vmem:[#allocation2 + $0x10] sm:$0xff]
    %v87 = vld [vmem:[#allocation2 + $0x18] sm:$0xff]
    %v88 = vld [vmem:[#allocation2 + $0x20] sm:$0xff]
    %v89 = vld [vmem:[#allocation2 + $0x28] sm:$0xff]
    %v90 = vld [vmem:[#allocation2 + $0x30] sm:$0xff]
    %v91 = vpack.c.bf16 %v84, %v84
    %v92 = vpack.c.bf16 %v85, %v85
    %v93 = vpack.c.bf16 %v86, %v86
    %v94 = vpack.c.bf16 %v87, %v87
    %v95 = vpack.c.bf16 %v88, %v88
    %v96 = vpack.c.bf16 %v89, %v89
    %v97 = vpack.c.bf16 %v90, %v90
    %v98 = vld [vmem:[#allocation5] sm:$0xff]
    %v99 = vld [vmem:[#allocation5 + $0x8] sm:$0xff]
    %v100 = vld [vmem:[#allocation5 + $0x10] sm:$0xff]
    %v101 = vld [vmem:[#allocation5 + $0x18] sm:$0xff]
    %v102 = vld [vmem:[#allocation5 + $0x20] sm:$0xff]
    %v103 = vld [vmem:[#allocation5 + $0x28] sm:$0xff]
    %v104 = vld [vmem:[#allocation5 + $0x30] sm:$0xff]
    %v105 = vld [vmem:[#allocation5 + $0x38] sm:$0xff]
    %v106 = vld [vmem:[#allocation5 + $0x40] sm:$0xff]
    %v107 = vld [vmem:[#allocation5 + $0x48] sm:$0xff]
    %v108 = vld [vmem:[#allocation5 + $0x50] sm:$0xff]
    %v109 = vld [vmem:[#allocation5 + $0x58] sm:$0xff]
    %v110 = vld [vmem:[#allocation5 + $0x60] sm:$0xff]
    %v111 = vld [vmem:[#allocation5 + $0x68] sm:$0xff]
    %v112 = vld [vmem:[#allocation5 + $0x70] sm:$0xff]
    %v113 = vld [vmem:[#allocation5 + $0x78] sm:$0xff]
    %v114 = vld [vmem:[#allocation5 + $0x80] sm:$0xff]
    %v115 = vld [vmem:[#allocation5 + $0x88] sm:$0xff]
    %v116 = vld [vmem:[#allocation5 + $0x90] sm:$0xff]
    %v117 = vld [vmem:[#allocation5 + $0x98] sm:$0xff]
    %v118 = vld [vmem:[#allocation5 + $0xa0] sm:$0xff]
    %v119 = vld [vmem:[#allocation5 + $0xa8] sm:$0xff]
    %v120 = vld [vmem:[#allocation5 + $0xb0] sm:$0xff]
    %v121 = vld [vmem:[#allocation5 + $0xb8] sm:$0xff]
    %v122 = vld [vmem:[#allocation5 + $0xc0] sm:$0xff]
    %v123 = vld [vmem:[#allocation5 + $0xc8] sm:$0xff]
    %v124 = vld [vmem:[#allocation5 + $0xd0] sm:$0xff]
    %v125 = vld [vmem:[#allocation5 + $0xd8] sm:$0xff]
    %v126 = vld [vmem:[#allocation5 + $0xe0] sm:$0xff]
    %v127 = vld [vmem:[#allocation5 + $0xe8] sm:$0xff]
    %v128 = vld [vmem:[#allocation5 + $0xf0] sm:$0xff]
    %v129 = vld [vmem:[#allocation5 + $0xf8] sm:$0xff]
    %v130 = vld [vmem:[#allocation5 + $0x100] sm:$0xff]
    %v131 = vld [vmem:[#allocation5 + $0x108] sm:$0xff]
    %v132 = vld [vmem:[#allocation5 + $0x110] sm:$0xff]
    %v133 = vld [vmem:[#allocation5 + $0x118] sm:$0xff]
    %v134 = vld [vmem:[#allocation5 + $0x120] sm:$0xff]
    %v135 = vld [vmem:[#allocation5 + $0x128] sm:$0xff]
    %v136 = vld [vmem:[#allocation5 + $0x130] sm:$0xff]
    %v137 = vld [vmem:[#allocation5 + $0x138] sm:$0xff]
    %v138 = vld [vmem:[#allocation5 + $0x140] sm:$0xff]
    %v139 = vld [vmem:[#allocation5 + $0x148] sm:$0xff]
    %v140 = vld [vmem:[#allocation5 + $0x150] sm:$0xff]
    %v141 = vld [vmem:[#allocation5 + $0x158] sm:$0xff]
    %v142 = vld [vmem:[#allocation5 + $0x160] sm:$0xff]
    %v143 = vld [vmem:[#allocation5 + $0x168] sm:$0xff]
    %v144 = vld [vmem:[#allocation5 + $0x170] sm:$0xff]
    %v145 = vld [vmem:[#allocation5 + $0x178] sm:$0xff]
    %v146 = vld [vmem:[#allocation5 + $0x180] sm:$0xff]
    %v147 = vld [vmem:[#allocation5 + $0x188] sm:$0xff]
    %v148 = vld [vmem:[#allocation5 + $0x190] sm:$0xff]
    %v149 = vld [vmem:[#allocation5 + $0x198] sm:$0xff]
    %v150 = vld [vmem:[#allocation5 + $0x1a0] sm:$0xff]
    %v151 = vld [vmem:[#allocation5 + $0x1a8] sm:$0xff]
    %v152 = vld [vmem:[#allocation5 + $0x1b0] sm:$0xff]
    %v153 = vld [vmem:[#allocation5 + $0x1b8] sm:$0xff]
    %v154 = vld [vmem:[#allocation5 + $0x1c0] sm:$0xff]
    %v155 = vld [vmem:[#allocation5 + $0x1c8] sm:$0xff]
    %v156 = vld [vmem:[#allocation5 + $0x1d0] sm:$0xff]
    %v157 = vld [vmem:[#allocation5 + $0x1d8] sm:$0xff]
    %v158 = vld [vmem:[#allocation5 + $0x1e0] sm:$0xff]
    %v159 = vld [vmem:[#allocation5 + $0x1e8] sm:$0xff]
    %v160 = vld [vmem:[#allocation5 + $0x1f0] sm:$0xff]
    %v161 = vld [vmem:[#allocation5 + $0x1f8] sm:$0xff]
    %v162 = vld [vmem:[#allocation5 + $0x200] sm:$0xff]
    %v163 = vld [vmem:[#allocation5 + $0x208] sm:$0xff]
    %v164 = vld [vmem:[#allocation5 + $0x210] sm:$0xff]
    %v165 = vld [vmem:[#allocation5 + $0x218] sm:$0xff]
    %v166 = vld [vmem:[#allocation5 + $0x220] sm:$0xff]
    %v167 = vld [vmem:[#allocation5 + $0x228] sm:$0xff]
    %v168 = vld [vmem:[#allocation5 + $0x230] sm:$0xff]
    %v169 = vld [vmem:[#allocation5 + $0x238] sm:$0xff]
    %v170 = vld [vmem:[#allocation5 + $0x240] sm:$0xff]
    %v171 = vld [vmem:[#allocation5 + $0x248] sm:$0xff]
    %v172 = vld [vmem:[#allocation5 + $0x250] sm:$0xff]
    %v173 = vld [vmem:[#allocation5 + $0x258] sm:$0xff]
    %v174 = vld [vmem:[#allocation5 + $0x260] sm:$0xff]
    %v175 = vld [vmem:[#allocation5 + $0x268] sm:$0xff]
    %v176 = vld [vmem:[#allocation5 + $0x270] sm:$0xff]
    %v177 = vld [vmem:[#allocation5 + $0x278] sm:$0xff]
    %v178 = vld [vmem:[#allocation5 + $0x280] sm:$0xff]
    %v179 = vld [vmem:[#allocation5 + $0x288] sm:$0xff]
    %v180 = vld [vmem:[#allocation5 + $0x290] sm:$0xff]
    %v181 = vld [vmem:[#allocation5 + $0x298] sm:$0xff]
    %v182 = vld [vmem:[#allocation5 + $0x2a0] sm:$0xff]
    %v183 = vld [vmem:[#allocation5 + $0x2a8] sm:$0xff]
    %v184 = vld [vmem:[#allocation5 + $0x2b0] sm:$0xff]
    %v185 = vld [vmem:[#allocation5 + $0x2b8] sm:$0xff]
    %v186 = vld [vmem:[#allocation5 + $0x2c0] sm:$0xff]
    %v187 = vld [vmem:[#allocation5 + $0x2c8] sm:$0xff]
    %v188 = vld [vmem:[#allocation5 + $0x2d0] sm:$0xff]
    %v189 = vld [vmem:[#allocation5 + $0x2d8] sm:$0xff]
    %v190 = vld [vmem:[#allocation5 + $0x2e0] sm:$0xff]
    %v191 = vld [vmem:[#allocation5 + $0x2e8] sm:$0xff]
    %v192 = vld [vmem:[#allocation5 + $0x2f0] sm:$0xff]
    %v193 = vld [vmem:[#allocation5 + $0x2f8] sm:$0xff]
    %v194 = vld [vmem:[#allocation5 + $0x300] sm:$0xff]
    %v195 = vld [vmem:[#allocation5 + $0x308] sm:$0xff]
    %v196 = vld [vmem:[#allocation5 + $0x310] sm:$0xff]
    %v197 = vld [vmem:[#allocation5 + $0x318] sm:$0xff]
    %v198 = vld [vmem:[#allocation5 + $0x320] sm:$0xff]
    %v199 = vld [vmem:[#allocation5 + $0x328] sm:$0xff]
    %v200 = vld [vmem:[#allocation5 + $0x330] sm:$0xff]
    %v201 = vld [vmem:[#allocation5 + $0x338] sm:$0xff]
    %v202 = vld [vmem:[#allocation5 + $0x340] sm:$0xff]
    %v203 = vld [vmem:[#allocation5 + $0x348] sm:$0xff]
    %v204 = vld [vmem:[#allocation5 + $0x350] sm:$0xff]
    %v205 = vld [vmem:[#allocation5 + $0x358] sm:$0xff]
    %v206 = vld [vmem:[#allocation5 + $0x360] sm:$0xff]
    %v207 = vld [vmem:[#allocation5 + $0x368] sm:$0xff]
    %v208 = vld [vmem:[#allocation5 + $0x370] sm:$0xff]
    %v209 = vld [vmem:[#allocation5 + $0x378] sm:$0xff]
    %v210 = vld [vmem:[#allocation5 + $0x380] sm:$0xff]
    %v211 = vld [vmem:[#allocation5 + $0x388] sm:$0xff]
    %v212 = vld [vmem:[#allocation5 + $0x390] sm:$0xff]
    %v213 = vld [vmem:[#allocation5 + $0x398] sm:$0xff]
    %v214 = vld [vmem:[#allocation5 + $0x3a0] sm:$0xff]
    %v215 = vld [vmem:[#allocation5 + $0x3a8] sm:$0xff]
    %v216 = vld [vmem:[#allocation5 + $0x3b0] sm:$0xff]
    %v217 = vld [vmem:[#allocation5 + $0x3b8] sm:$0xff]
    %v218 = vld [vmem:[#allocation5 + $0x3c0] sm:$0xff]
    %v219 = vld [vmem:[#allocation5 + $0x3c8] sm:$0xff]
    %v220 = vld [vmem:[#allocation5 + $0x3d0] sm:$0xff]
    %v221 = vld [vmem:[#allocation5 + $0x3d8] sm:$0xff]
    %v222 = vld [vmem:[#allocation5 + $0x3e0] sm:$0xff]
    %v223 = vld [vmem:[#allocation5 + $0x3e8] sm:$0xff]
    %v224 = vld [vmem:[#allocation5 + $0x3f0] sm:$0xff]
    %v225 = vld [vmem:[#allocation5 + $0x3f8] sm:$0xff]
    %v226 = vld [vmem:[#allocation5 + $0x400] sm:$0xff]
    %v227 = vld [vmem:[#allocation5 + $0x408] sm:$0xff]
    %v228 = vld [vmem:[#allocation5 + $0x410] sm:$0xff]
    %v229 = vld [vmem:[#allocation5 + $0x418] sm:$0xff]
    %v230 = vld [vmem:[#allocation5 + $0x420] sm:$0xff]
    %v231 = vld [vmem:[#allocation5 + $0x428] sm:$0xff]
    %v232 = vld [vmem:[#allocation5 + $0x430] sm:$0xff]
    %v233 = vld [vmem:[#allocation5 + $0x438] sm:$0xff]
    %v234 = vld [vmem:[#allocation5 + $0x440] sm:$0xff]
    %v235 = vld [vmem:[#allocation5 + $0x448] sm:$0xff]
    %v236 = vld [vmem:[#allocation5 + $0x450] sm:$0xff]
    %v237 = vld [vmem:[#allocation5 + $0x458] sm:$0xff]
    %v238 = vld [vmem:[#allocation5 + $0x460] sm:$0xff]
    %v239 = vld [vmem:[#allocation5 + $0x468] sm:$0xff]
    %v240 = vld [vmem:[#allocation5 + $0x470] sm:$0xff]
    %v241 = vld [vmem:[#allocation5 + $0x478] sm:$0xff]
    %v242 = vld [vmem:[#allocation5 + $0x480] sm:$0xff]
    %v243 = vld [vmem:[#allocation5 + $0x488] sm:$0xff]
    %v244 = vld [vmem:[#allocation5 + $0x490] sm:$0xff]
    %v245 = vld [vmem:[#allocation5 + $0x498] sm:$0xff]
    %v246 = vld [vmem:[#allocation5 + $0x4a0] sm:$0xff]
    %v247 = vld [vmem:[#allocation5 + $0x4a8] sm:$0xff]
    %v248 = vld [vmem:[#allocation5 + $0x4b0] sm:$0xff]
    %v249 = vld [vmem:[#allocation5 + $0x4b8] sm:$0xff]
    %v250 = vld [vmem:[#allocation5 + $0x4c0] sm:$0xff]
    %v251 = vld [vmem:[#allocation5 + $0x4c8] sm:$0xff]
    %v252 = vld [vmem:[#allocation5 + $0x4d0] sm:$0xff]
    %v253 = vld [vmem:[#allocation5 + $0x4d8] sm:$0xff]
    %v254 = vld [vmem:[#allocation5 + $0x4e0] sm:$0xff]
    %v255 = vld [vmem:[#allocation5 + $0x4e8] sm:$0xff]
    %v256 = vld [vmem:[#allocation5 + $0x4f0] sm:$0xff]
    %v257 = vld [vmem:[#allocation5 + $0x4f8] sm:$0xff]
    %v258 = vld [vmem:[#allocation5 + $0x500] sm:$0xff]
    %v259 = vld [vmem:[#allocation5 + $0x508] sm:$0xff]
    %v260 = vld [vmem:[#allocation5 + $0x510] sm:$0xff]
    %v261 = vld [vmem:[#allocation5 + $0x518] sm:$0xff]
    %v262 = vld [vmem:[#allocation5 + $0x520] sm:$0xff]
    %v263 = vld [vmem:[#allocation5 + $0x528] sm:$0xff]
    %v264 = vld [vmem:[#allocation5 + $0x530] sm:$0xff]
    %v265 = vld [vmem:[#allocation5 + $0x538] sm:$0xff]
    %v266 = vld [vmem:[#allocation5 + $0x540] sm:$0xff]
    %v267 = vld [vmem:[#allocation5 + $0x548] sm:$0xff]
    %v268 = vld [vmem:[#allocation5 + $0x550] sm:$0xff]
    %v269 = vld [vmem:[#allocation5 + $0x558] sm:$0xff]
    %v270 = vld [vmem:[#allocation5 + $0x560] sm:$0xff]
    %v271 = vld [vmem:[#allocation5 + $0x568] sm:$0xff]
    %v272 = vld [vmem:[#allocation5 + $0x570] sm:$0xff]
    %v273 = vld [vmem:[#allocation5 + $0x578] sm:$0xff]
    %v274 = vld [vmem:[#allocation5 + $0x580] sm:$0xff]
    %v275 = vld [vmem:[#allocation5 + $0x588] sm:$0xff]
    %v276 = vld [vmem:[#allocation5 + $0x590] sm:$0xff]
    %v277 = vld [vmem:[#allocation5 + $0x598] sm:$0xff]
    %v278 = vld [vmem:[#allocation5 + $0x5a0] sm:$0xff]
    %v279 = vld [vmem:[#allocation5 + $0x5a8] sm:$0xff]
    %v280 = vld [vmem:[#allocation5 + $0x5b0] sm:$0xff]
    %v281 = vld [vmem:[#allocation5 + $0x5b8] sm:$0xff]
    %v282 = vld [vmem:[#allocation5 + $0x5c0] sm:$0xff]
    %v283 = vld [vmem:[#allocation5 + $0x5c8] sm:$0xff]
    %v284 = vld [vmem:[#allocation5 + $0x5d0] sm:$0xff]
    %v285 = vld [vmem:[#allocation5 + $0x5d8] sm:$0xff]
    %v286 = vld [vmem:[#allocation5 + $0x5e0] sm:$0xff]
    %v287 = vld [vmem:[#allocation5 + $0x5e8] sm:$0xff]
    %v288 = vld [vmem:[#allocation5 + $0x5f0] sm:$0xff]
    %v289 = vld [vmem:[#allocation5 + $0x5f8] sm:$0xff]
    %v290 = vld [vmem:[#allocation5 + $0x600] sm:$0xff]
    %v291 = vld [vmem:[#allocation5 + $0x608] sm:$0xff]
    %v292 = vld [vmem:[#allocation5 + $0x610] sm:$0xff]
    %v293 = vld [vmem:[#allocation5 + $0x618] sm:$0xff]
    %v294 = vld [vmem:[#allocation5 + $0x620] sm:$0xff]
    %v295 = vld [vmem:[#allocation5 + $0x628] sm:$0xff]
    %v296 = vld [vmem:[#allocation5 + $0x630] sm:$0xff]
    %v297 = vld [vmem:[#allocation5 + $0x638] sm:$0xff]
    %v298 = vld [vmem:[#allocation5 + $0x640] sm:$0xff]
    %v299 = vld [vmem:[#allocation5 + $0x648] sm:$0xff]
    %v300 = vld [vmem:[#allocation5 + $0x650] sm:$0xff]
    %v301 = vld [vmem:[#allocation5 + $0x658] sm:$0xff]
    %v302 = vld [vmem:[#allocation5 + $0x660] sm:$0xff]
    %v303 = vld [vmem:[#allocation5 + $0x668] sm:$0xff]
    %v304 = vld [vmem:[#allocation5 + $0x670] sm:$0xff]
    %v305 = vld [vmem:[#allocation5 + $0x678] sm:$0xff]
    %v306 = vld [vmem:[#allocation5 + $0x680] sm:$0xff]
    %v307 = vld [vmem:[#allocation5 + $0x688] sm:$0xff]
    %v308 = vld [vmem:[#allocation5 + $0x690] sm:$0xff]
    %v309 = vld [vmem:[#allocation5 + $0x698] sm:$0xff]
    %v310 = vld [vmem:[#allocation5 + $0x6a0] sm:$0xff]
    %v311 = vld [vmem:[#allocation5 + $0x6a8] sm:$0xff]
    %v312 = vld [vmem:[#allocation5 + $0x6b0] sm:$0xff]
    %v313 = vld [vmem:[#allocation5 + $0x6b8] sm:$0xff]
    %v314 = vld [vmem:[#allocation5 + $0x6c0] sm:$0xff]
    %v315 = vld [vmem:[#allocation5 + $0x6c8] sm:$0xff]
    %v316 = vld [vmem:[#allocation5 + $0x6d0] sm:$0xff]
    %v317 = vld [vmem:[#allocation5 + $0x6d8] sm:$0xff]
    %v318 = vld [vmem:[#allocation5 + $0x6e0] sm:$0xff]
    %v319 = vld [vmem:[#allocation5 + $0x6e8] sm:$0xff]
    %v320 = vld [vmem:[#allocation5 + $0x6f0] sm:$0xff]
    %v321 = vld [vmem:[#allocation5 + $0x6f8] sm:$0xff]
    %v322 = vld [vmem:[%s2] sm:$0xf]
    %v324 = vlaneseq
    %v325 = vshrl.u32 %v324, 7
    %v326 = vsub.s32 0, %v325
    %v327 = vrot.slane %v322, %v326
    %v328 = vlaneseq
    %v329 = vshrl.u32 %v328, 7
    %v330 = vsub.s32 1, %v329
    %v331 = vrot.slane %v322, %v330
    %v332 = vlaneseq
    %v333 = vshrl.u32 %v332, 7
    %v334 = vsub.s32 2, %v333
    %v335 = vrot.slane %v322, %v334
    %v336 = vlaneseq
    %v337 = vshrl.u32 %v336, 7
    %v338 = vsub.s32 3, %v337
    %v339 = vrot.slane %v322, %v338
    %v568 = vunpack.c.l.b16 %v98
    %v569 = vunpack.c.h.b16 %v98
    %v570 = vunpack.c.l.b16 %v99
    %v571 = vunpack.c.h.b16 %v99
    %v572 = vunpack.c.l.b16 %v100
    %v573 = vunpack.c.h.b16 %v100
    %v574 = vunpack.c.l.b16 %v101
    %v575 = vunpack.c.h.b16 %v101
    %v576 = vunpack.c.l.b16 %v102
    %v577 = vunpack.c.h.b16 %v102
    %v578 = vunpack.c.l.b16 %v103
    %v579 = vunpack.c.h.b16 %v103
    %v580 = vunpack.c.l.b16 %v104
    %v581 = vunpack.c.h.b16 %v104
    %v582 = vunpack.c.l.b16 %v105
    %v583 = vunpack.c.h.b16 %v105
    %v584 = vunpack.c.l.b16 %v106
    %v585 = vunpack.c.h.b16 %v106
    %v586 = vunpack.c.l.b16 %v107
    %v587 = vunpack.c.h.b16 %v107
    %v588 = vunpack.c.l.b16 %v108
    %v589 = vunpack.c.h.b16 %v108
    %v590 = vunpack.c.l.b16 %v109
    %v591 = vunpack.c.h.b16 %v109
    %v592 = vunpack.c.l.b16 %v110
    %v593 = vunpack.c.h.b16 %v110
    %v594 = vunpack.c.l.b16 %v111
    %v595 = vunpack.c.h.b16 %v111
    %v596 = vunpack.c.l.b16 %v112
    %v597 = vunpack.c.h.b16 %v112
    %v598 = vunpack.c.l.b16 %v113
    %v599 = vunpack.c.h.b16 %v113
    %v600 = vunpack.c.l.b16 %v114
    %v601 = vunpack.c.h.b16 %v114
    %v602 = vunpack.c.l.b16 %v115
    %v603 = vunpack.c.h.b16 %v115
    %v604 = vunpack.c.l.b16 %v116
    %v605 = vunpack.c.h.b16 %v116
    %v606 = vunpack.c.l.b16 %v117
    %v607 = vunpack.c.h.b16 %v117
    %v608 = vunpack.c.l.b16 %v118
    %v609 = vunpack.c.h.b16 %v118
    %v610 = vunpack.c.l.b16 %v119
    %v611 = vunpack.c.h.b16 %v119
    %v612 = vunpack.c.l.b16 %v120
    %v613 = vunpack.c.h.b16 %v120
    %v614 = vunpack.c.l.b16 %v121
    %v615 = vunpack.c.h.b16 %v121
    %v616 = vunpack.c.l.b16 %v122
    %v617 = vunpack.c.h.b16 %v122
    %v618 = vunpack.c.l.b16 %v123
    %v619 = vunpack.c.h.b16 %v123
    %v620 = vunpack.c.l.b16 %v124
    %v621 = vunpack.c.h.b16 %v124
    %v622 = vunpack.c.l.b16 %v125
    %v623 = vunpack.c.h.b16 %v125
    %v624 = vunpack.c.l.b16 %v126
    %v625 = vunpack.c.h.b16 %v126
    %v626 = vunpack.c.l.b16 %v127
    %v627 = vunpack.c.h.b16 %v127
    %v628 = vunpack.c.l.b16 %v128
    %v629 = vunpack.c.h.b16 %v128
    %v630 = vunpack.c.l.b16 %v129
    %v631 = vunpack.c.h.b16 %v129
    %v632 = vunpack.c.l.b16 %v130
    %v633 = vunpack.c.h.b16 %v130
    %v634 = vunpack.c.l.b16 %v131
    %v635 = vunpack.c.h.b16 %v131
    %v636 = vunpack.c.l.b16 %v132
    %v637 = vunpack.c.h.b16 %v132
    %v638 = vunpack.c.l.b16 %v133
    %v639 = vunpack.c.h.b16 %v133
    %v640 = vunpack.c.l.b16 %v134
    %v641 = vunpack.c.h.b16 %v134
    %v642 = vunpack.c.l.b16 %v135
    %v643 = vunpack.c.h.b16 %v135
    %v644 = vunpack.c.l.b16 %v136
    %v645 = vunpack.c.h.b16 %v136
    %v646 = vunpack.c.l.b16 %v137
    %v647 = vunpack.c.h.b16 %v137
    %v648 = vunpack.c.l.b16 %v138
    %v649 = vunpack.c.h.b16 %v138
    %v650 = vunpack.c.l.b16 %v139
    %v651 = vunpack.c.h.b16 %v139
    %v652 = vunpack.c.l.b16 %v140
    %v653 = vunpack.c.h.b16 %v140
    %v654 = vunpack.c.l.b16 %v141
    %v655 = vunpack.c.h.b16 %v141
    %v656 = vunpack.c.l.b16 %v142
    %v657 = vunpack.c.h.b16 %v142
    %v658 = vunpack.c.l.b16 %v143
    %v659 = vunpack.c.h.b16 %v143
    %v660 = vunpack.c.l.b16 %v144
    %v661 = vunpack.c.h.b16 %v144
    %v662 = vunpack.c.l.b16 %v145
    %v663 = vunpack.c.h.b16 %v145
    %v664 = vunpack.c.l.b16 %v146
    %v665 = vunpack.c.h.b16 %v146
    %v666 = vunpack.c.l.b16 %v147
    %v667 = vunpack.c.h.b16 %v147
    %v668 = vunpack.c.l.b16 %v148
    %v669 = vunpack.c.h.b16 %v148
    %v670 = vunpack.c.l.b16 %v149
    %v671 = vunpack.c.h.b16 %v149
    %v672 = vunpack.c.l.b16 %v150
    %v673 = vunpack.c.h.b16 %v150
    %v674 = vunpack.c.l.b16 %v151
    %v675 = vunpack.c.h.b16 %v151
    %v676 = vunpack.c.l.b16 %v152
    %v677 = vunpack.c.h.b16 %v152
    %v678 = vunpack.c.l.b16 %v153
    %v679 = vunpack.c.h.b16 %v153
    %v680 = vunpack.c.l.b16 %v154
    %v681 = vunpack.c.h.b16 %v154
    %v682 = vunpack.c.l.b16 %v155
    %v683 = vunpack.c.h.b16 %v155
    %v684 = vunpack.c.l.b16 %v156
    %v685 = vunpack.c.h.b16 %v156
    %v686 = vunpack.c.l.b16 %v157
    %v687 = vunpack.c.h.b16 %v157
    %v688 = vunpack.c.l.b16 %v158
    %v689 = vunpack.c.h.b16 %v158
    %v690 = vunpack.c.l.b16 %v159
    %v691 = vunpack.c.h.b16 %v159
    %v692 = vunpack.c.l.b16 %v160
    %v693 = vunpack.c.h.b16 %v160
    %v694 = vunpack.c.l.b16 %v161
    %v695 = vunpack.c.h.b16 %v161
    %v696 = vunpack.c.l.b16 %v162
    %v697 = vunpack.c.h.b16 %v162
    %v698 = vunpack.c.l.b16 %v163
    %v699 = vunpack.c.h.b16 %v163
    %v700 = vunpack.c.l.b16 %v164
    %v701 = vunpack.c.h.b16 %v164
    %v702 = vunpack.c.l.b16 %v165
    %v703 = vunpack.c.h.b16 %v165
    %v704 = vunpack.c.l.b16 %v166
    %v705 = vunpack.c.h.b16 %v166
    %v706 = vunpack.c.l.b16 %v167
    %v707 = vunpack.c.h.b16 %v167
    %v708 = vunpack.c.l.b16 %v168
    %v709 = vunpack.c.h.b16 %v168
    %v710 = vunpack.c.l.b16 %v169
    %v711 = vunpack.c.h.b16 %v169
    %v712 = vunpack.c.l.b16 %v170
    %v713 = vunpack.c.h.b16 %v170
    %v714 = vunpack.c.l.b16 %v171
    %v715 = vunpack.c.h.b16 %v171
    %v716 = vunpack.c.l.b16 %v172
    %v717 = vunpack.c.h.b16 %v172
    %v718 = vunpack.c.l.b16 %v173
    %v719 = vunpack.c.h.b16 %v173
    %v720 = vunpack.c.l.b16 %v174
    %v721 = vunpack.c.h.b16 %v174
    %v722 = vunpack.c.l.b16 %v175
    %v723 = vunpack.c.h.b16 %v175
    %v724 = vunpack.c.l.b16 %v176
    %v725 = vunpack.c.h.b16 %v176
    %v726 = vunpack.c.l.b16 %v177
    %v727 = vunpack.c.h.b16 %v177
    %v728 = vunpack.c.l.b16 %v178
    %v729 = vunpack.c.h.b16 %v178
    %v730 = vunpack.c.l.b16 %v179
    %v731 = vunpack.c.h.b16 %v179
    %v732 = vunpack.c.l.b16 %v180
    %v733 = vunpack.c.h.b16 %v180
    %v734 = vunpack.c.l.b16 %v181
    %v735 = vunpack.c.h.b16 %v181
    %v736 = vunpack.c.l.b16 %v182
    %v737 = vunpack.c.h.b16 %v182
    %v738 = vunpack.c.l.b16 %v183
    %v739 = vunpack.c.h.b16 %v183
    %v740 = vunpack.c.l.b16 %v184
    %v741 = vunpack.c.h.b16 %v184
    %v742 = vunpack.c.l.b16 %v185
    %v743 = vunpack.c.h.b16 %v185
    %v744 = vunpack.c.l.b16 %v186
    %v745 = vunpack.c.h.b16 %v186
    %v746 = vunpack.c.l.b16 %v187
    %v747 = vunpack.c.h.b16 %v187
    %v748 = vunpack.c.l.b16 %v188
    %v749 = vunpack.c.h.b16 %v188
    %v750 = vunpack.c.l.b16 %v189
    %v751 = vunpack.c.h.b16 %v189
    %v752 = vunpack.c.l.b16 %v190
    %v753 = vunpack.c.h.b16 %v190
    %v754 = vunpack.c.l.b16 %v191
    %v755 = vunpack.c.h.b16 %v191
    %v756 = vunpack.c.l.b16 %v192
    %v757 = vunpack.c.h.b16 %v192
    %v758 = vunpack.c.l.b16 %v193
    %v759 = vunpack.c.h.b16 %v193
    %v760 = vunpack.c.l.b16 %v194
    %v761 = vunpack.c.h.b16 %v194
    %v762 = vunpack.c.l.b16 %v195
    %v763 = vunpack.c.h.b16 %v195
    %v764 = vunpack.c.l.b16 %v196
    %v765 = vunpack.c.h.b16 %v196
    %v766 = vunpack.c.l.b16 %v197
    %v767 = vunpack.c.h.b16 %v197
    %v768 = vunpack.c.l.b16 %v198
    %v769 = vunpack.c.h.b16 %v198
    %v770 = vunpack.c.l.b16 %v199
    %v771 = vunpack.c.h.b16 %v199
    %v772 = vunpack.c.l.b16 %v200
    %v773 = vunpack.c.h.b16 %v200
    %v774 = vunpack.c.l.b16 %v201
    %v775 = vunpack.c.h.b16 %v201
    %v776 = vunpack.c.l.b16 %v202
    %v777 = vunpack.c.h.b16 %v202
    %v778 = vunpack.c.l.b16 %v203
    %v779 = vunpack.c.h.b16 %v203
    %v780 = vunpack.c.l.b16 %v204
    %v781 = vunpack.c.h.b16 %v204
    %v782 = vunpack.c.l.b16 %v205
    %v783 = vunpack.c.h.b16 %v205
    %v784 = vunpack.c.l.b16 %v206
    %v785 = vunpack.c.h.b16 %v206
    %v786 = vunpack.c.l.b16 %v207
    %v787 = vunpack.c.h.b16 %v207
    %v788 = vunpack.c.l.b16 %v208
    %v789 = vunpack.c.h.b16 %v208
    %v790 = vunpack.c.l.b16 %v209
    %v791 = vunpack.c.h.b16 %v209
    %v792 = vunpack.c.l.b16 %v210
    %v793 = vunpack.c.h.b16 %v210
    %v794 = vunpack.c.l.b16 %v211
    %v795 = vunpack.c.h.b16 %v211
    %v796 = vunpack.c.l.b16 %v212
    %v797 = vunpack.c.h.b16 %v212
    %v798 = vunpack.c.l.b16 %v213
    %v799 = vunpack.c.h.b16 %v213
    %v800 = vunpack.c.l.b16 %v214
    %v801 = vunpack.c.h.b16 %v214
    %v802 = vunpack.c.l.b16 %v215
    %v803 = vunpack.c.h.b16 %v215
    %v804 = vunpack.c.l.b16 %v216
    %v805 = vunpack.c.h.b16 %v216
    %v806 = vunpack.c.l.b16 %v217
    %v807 = vunpack.c.h.b16 %v217
    %v808 = vunpack.c.l.b16 %v218
    %v809 = vunpack.c.h.b16 %v218
    %v810 = vunpack.c.l.b16 %v219
    %v811 = vunpack.c.h.b16 %v219
    %v812 = vunpack.c.l.b16 %v220
    %v813 = vunpack.c.h.b16 %v220
    %v814 = vunpack.c.l.b16 %v221
    %v815 = vunpack.c.h.b16 %v221
    %v816 = vunpack.c.l.b16 %v222
    %v817 = vunpack.c.h.b16 %v222
    %v818 = vunpack.c.l.b16 %v223
    %v819 = vunpack.c.h.b16 %v223
    %v820 = vunpack.c.l.b16 %v224
    %v821 = vunpack.c.h.b16 %v224
    %v822 = vunpack.c.l.b16 %v225
    %v823 = vunpack.c.h.b16 %v225
    %v824 = vunpack.c.l.b16 %v226
    %v825 = vunpack.c.h.b16 %v226
    %v826 = vunpack.c.l.b16 %v227
    %v827 = vunpack.c.h.b16 %v227
    %v828 = vunpack.c.l.b16 %v228
    %v829 = vunpack.c.h.b16 %v228
    %v830 = vunpack.c.l.b16 %v229
    %v831 = vunpack.c.h.b16 %v229
    %v832 = vunpack.c.l.b16 %v230
    %v833 = vunpack.c.h.b16 %v230
    %v834 = vunpack.c.l.b16 %v231
    %v835 = vunpack.c.h.b16 %v231
    %v836 = vunpack.c.l.b16 %v232
    %v837 = vunpack.c.h.b16 %v232
    %v838 = vunpack.c.l.b16 %v233
    %v839 = vunpack.c.h.b16 %v233
    %v840 = vunpack.c.l.b16 %v234
    %v841 = vunpack.c.h.b16 %v234
    %v842 = vunpack.c.l.b16 %v235
    %v843 = vunpack.c.h.b16 %v235
    %v844 = vunpack.c.l.b16 %v236
    %v845 = vunpack.c.h.b16 %v236
    %v846 = vunpack.c.l.b16 %v237
    %v847 = vunpack.c.h.b16 %v237
    %v848 = vunpack.c.l.b16 %v238
    %v849 = vunpack.c.h.b16 %v238
    %v850 = vunpack.c.l.b16 %v239
    %v851 = vunpack.c.h.b16 %v239
    %v852 = vunpack.c.l.b16 %v240
    %v853 = vunpack.c.h.b16 %v240
    %v854 = vunpack.c.l.b16 %v241
    %v855 = vunpack.c.h.b16 %v241
    %v856 = vunpack.c.l.b16 %v242
    %v857 = vunpack.c.h.b16 %v242
    %v858 = vunpack.c.l.b16 %v243
    %v859 = vunpack.c.h.b16 %v243
    %v860 = vunpack.c.l.b16 %v244
    %v861 = vunpack.c.h.b16 %v244
    %v862 = vunpack.c.l.b16 %v245
    %v863 = vunpack.c.h.b16 %v245
    %v864 = vunpack.c.l.b16 %v246
    %v865 = vunpack.c.h.b16 %v246
    %v866 = vunpack.c.l.b16 %v247
    %v867 = vunpack.c.h.b16 %v247
    %v868 = vunpack.c.l.b16 %v248
    %v869 = vunpack.c.h.b16 %v248
    %v870 = vunpack.c.l.b16 %v249
    %v871 = vunpack.c.h.b16 %v249
    %v872 = vunpack.c.l.b16 %v250
    %v873 = vunpack.c.h.b16 %v250
    %v874 = vunpack.c.l.b16 %v251
    %v875 = vunpack.c.h.b16 %v251
    %v876 = vunpack.c.l.b16 %v252
    %v877 = vunpack.c.h.b16 %v252
    %v878 = vunpack.c.l.b16 %v253
    %v879 = vunpack.c.h.b16 %v253
    %v880 = vunpack.c.l.b16 %v254
    %v881 = vunpack.c.h.b16 %v254
    %v882 = vunpack.c.l.b16 %v255
    %v883 = vunpack.c.h.b16 %v255
    %v884 = vunpack.c.l.b16 %v256
    %v885 = vunpack.c.h.b16 %v256
    %v886 = vunpack.c.l.b16 %v257
    %v887 = vunpack.c.h.b16 %v257
    %v888 = vunpack.c.l.b16 %v258
    %v889 = vunpack.c.h.b16 %v258
    %v890 = vunpack.c.l.b16 %v259
    %v891 = vunpack.c.h.b16 %v259
    %v892 = vunpack.c.l.b16 %v260
    %v893 = vunpack.c.h.b16 %v260
    %v894 = vunpack.c.l.b16 %v261
    %v895 = vunpack.c.h.b16 %v261
    %v896 = vunpack.c.l.b16 %v262
    %v897 = vunpack.c.h.b16 %v262
    %v898 = vunpack.c.l.b16 %v263
    %v899 = vunpack.c.h.b16 %v263
    %v900 = vunpack.c.l.b16 %v264
    %v901 = vunpack.c.h.b16 %v264
    %v902 = vunpack.c.l.b16 %v265
    %v903 = vunpack.c.h.b16 %v265
    %v904 = vunpack.c.l.b16 %v266
    %v905 = vunpack.c.h.b16 %v266
    %v906 = vunpack.c.l.b16 %v267
    %v907 = vunpack.c.h.b16 %v267
    %v908 = vunpack.c.l.b16 %v268
    %v909 = vunpack.c.h.b16 %v268
    %v910 = vunpack.c.l.b16 %v269
    %v911 = vunpack.c.h.b16 %v269
    %v912 = vunpack.c.l.b16 %v270
    %v913 = vunpack.c.h.b16 %v270
    %v914 = vunpack.c.l.b16 %v271
    %v915 = vunpack.c.h.b16 %v271
    %v916 = vunpack.c.l.b16 %v272
    %v917 = vunpack.c.h.b16 %v272
    %v918 = vunpack.c.l.b16 %v273
    %v919 = vunpack.c.h.b16 %v273
    %v920 = vunpack.c.l.b16 %v274
    %v921 = vunpack.c.h.b16 %v274
    %v922 = vunpack.c.l.b16 %v275
    %v923 = vunpack.c.h.b16 %v275
    %v924 = vunpack.c.l.b16 %v276
    %v925 = vunpack.c.h.b16 %v276
    %v926 = vunpack.c.l.b16 %v277
    %v927 = vunpack.c.h.b16 %v277
    %v928 = vunpack.c.l.b16 %v278
    %v929 = vunpack.c.h.b16 %v278
    %v930 = vunpack.c.l.b16 %v279
    %v931 = vunpack.c.h.b16 %v279
    %v932 = vunpack.c.l.b16 %v280
    %v933 = vunpack.c.h.b16 %v280
    %v934 = vunpack.c.l.b16 %v281
    %v935 = vunpack.c.h.b16 %v281
    %v936 = vunpack.c.l.b16 %v282
    %v937 = vunpack.c.h.b16 %v282
    %v938 = vunpack.c.l.b16 %v283
    %v939 = vunpack.c.h.b16 %v283
    %v940 = vunpack.c.l.b16 %v284
    %v941 = vunpack.c.h.b16 %v284
    %v942 = vunpack.c.l.b16 %v285
    %v943 = vunpack.c.h.b16 %v285
    %v944 = vunpack.c.l.b16 %v286
    %v945 = vunpack.c.h.b16 %v286
    %v946 = vunpack.c.l.b16 %v287
    %v947 = vunpack.c.h.b16 %v287
    %v948 = vunpack.c.l.b16 %v288
    %v949 = vunpack.c.h.b16 %v288
    %v950 = vunpack.c.l.b16 %v289
    %v951 = vunpack.c.h.b16 %v289
    %v952 = vunpack.c.l.b16 %v290
    %v953 = vunpack.c.h.b16 %v290
    %v954 = vunpack.c.l.b16 %v291
    %v955 = vunpack.c.h.b16 %v291
    %v956 = vunpack.c.l.b16 %v292
    %v957 = vunpack.c.h.b16 %v292
    %v958 = vunpack.c.l.b16 %v293
    %v959 = vunpack.c.h.b16 %v293
    %v960 = vunpack.c.l.b16 %v294
    %v961 = vunpack.c.h.b16 %v294
    %v962 = vunpack.c.l.b16 %v295
    %v963 = vunpack.c.h.b16 %v295
    %v964 = vunpack.c.l.b16 %v296
    %v965 = vunpack.c.h.b16 %v296
    %v966 = vunpack.c.l.b16 %v297
    %v967 = vunpack.c.h.b16 %v297
    %v968 = vunpack.c.l.b16 %v298
    %v969 = vunpack.c.h.b16 %v298
    %v970 = vunpack.c.l.b16 %v299
    %v971 = vunpack.c.h.b16 %v299
    %v972 = vunpack.c.l.b16 %v300
    %v973 = vunpack.c.h.b16 %v300
    %v974 = vunpack.c.l.b16 %v301
    %v975 = vunpack.c.h.b16 %v301
    %v976 = vunpack.c.l.b16 %v302
    %v977 = vunpack.c.h.b16 %v302
    %v978 = vunpack.c.l.b16 %v303
    %v979 = vunpack.c.h.b16 %v303
    %v980 = vunpack.c.l.b16 %v304
    %v981 = vunpack.c.h.b16 %v304
    %v982 = vunpack.c.l.b16 %v305
    %v983 = vunpack.c.h.b16 %v305
    %v984 = vunpack.c.l.b16 %v306
    %v985 = vunpack.c.h.b16 %v306
    %v986 = vunpack.c.l.b16 %v307
    %v987 = vunpack.c.h.b16 %v307
    %v988 = vunpack.c.l.b16 %v308
    %v989 = vunpack.c.h.b16 %v308
    %v990 = vunpack.c.l.b16 %v309
    %v991 = vunpack.c.h.b16 %v309
    %v992 = vunpack.c.l.b16 %v310
    %v993 = vunpack.c.h.b16 %v310
    %v994 = vunpack.c.l.b16 %v311
    %v995 = vunpack.c.h.b16 %v311
    %v996 = vunpack.c.l.b16 %v312
    %v997 = vunpack.c.h.b16 %v312
    %v998 = vunpack.c.l.b16 %v313
    %v999 = vunpack.c.h.b16 %v313
    %v1000 = vunpack.c.l.b16 %v314
    %v1001 = vunpack.c.h.b16 %v314
    %v1002 = vunpack.c.l.b16 %v315
    %v1003 = vunpack.c.h.b16 %v315
    %v1004 = vunpack.c.l.b16 %v316
    %v1005 = vunpack.c.h.b16 %v316
    %v1006 = vunpack.c.l.b16 %v317
    %v1007 = vunpack.c.h.b16 %v317
    %v1008 = vunpack.c.l.b16 %v318
    %v1009 = vunpack.c.h.b16 %v318
    %v1010 = vunpack.c.l.b16 %v319
    %v1011 = vunpack.c.h.b16 %v319
    %v1012 = vunpack.c.l.b16 %v320
    %v1013 = vunpack.c.h.b16 %v320
    %v1014 = vunpack.c.l.b16 %v321
    %v1015 = vunpack.c.h.b16 %v321
    %v1016 = vpack.c.b16 %v572, %v568
    %v1017 = vpack.c.b16 %v573, %v569
    %v1018 = vpack.c.b16 %v574, %v570
    %v1019 = vpack.c.b16 %v575, %v571
    %v1020 = vpack.c.b16 %v580, %v576
    %v1021 = vpack.c.b16 %v581, %v577
    %v1022 = vpack.c.b16 %v582, %v578
    %v1023 = vpack.c.b16 %v583, %v579
    %v1024 = vpack.c.b16 %v588, %v584
    %v1025 = vpack.c.b16 %v589, %v585
    %v1026 = vpack.c.b16 %v590, %v586
    %v1027 = vpack.c.b16 %v591, %v587
    %v1028 = vpack.c.b16 %v596, %v592
    %v1029 = vpack.c.b16 %v597, %v593
    %v1030 = vpack.c.b16 %v598, %v594
    %v1031 = vpack.c.b16 %v599, %v595
    %v1032 = vpack.c.b16 %v604, %v600
    %v1033 = vpack.c.b16 %v605, %v601
    %v1034 = vpack.c.b16 %v606, %v602
    %v1035 = vpack.c.b16 %v607, %v603
    %v1036 = vpack.c.b16 %v612, %v608
    %v1037 = vpack.c.b16 %v613, %v609
    %v1038 = vpack.c.b16 %v614, %v610
    %v1039 = vpack.c.b16 %v615, %v611
    %v1040 = vpack.c.b16 %v620, %v616
    %v1041 = vpack.c.b16 %v621, %v617
    %v1042 = vpack.c.b16 %v622, %v618
    %v1043 = vpack.c.b16 %v623, %v619
    %v1044 = vpack.c.b16 %v628, %v624
    %v1045 = vpack.c.b16 %v629, %v625
    %v1046 = vpack.c.b16 %v630, %v626
    %v1047 = vpack.c.b16 %v631, %v627
    %v1048 = vpack.c.b16 %v636, %v632
    %v1049 = vpack.c.b16 %v637, %v633
    %v1050 = vpack.c.b16 %v638, %v634
    %v1051 = vpack.c.b16 %v639, %v635
    %v1052 = vpack.c.b16 %v644, %v640
    %v1053 = vpack.c.b16 %v645, %v641
    %v1054 = vpack.c.b16 %v646, %v642
    %v1055 = vpack.c.b16 %v647, %v643
    %v1056 = vpack.c.b16 %v652, %v648
    %v1057 = vpack.c.b16 %v653, %v649
    %v1058 = vpack.c.b16 %v654, %v650
    %v1059 = vpack.c.b16 %v655, %v651
    %v1060 = vpack.c.b16 %v660, %v656
    %v1061 = vpack.c.b16 %v661, %v657
    %v1062 = vpack.c.b16 %v662, %v658
    %v1063 = vpack.c.b16 %v663, %v659
    %v1064 = vpack.c.b16 %v668, %v664
    %v1065 = vpack.c.b16 %v669, %v665
    %v1066 = vpack.c.b16 %v670, %v666
    %v1067 = vpack.c.b16 %v671, %v667
    %v1068 = vpack.c.b16 %v676, %v672
    %v1069 = vpack.c.b16 %v677, %v673
    %v1070 = vpack.c.b16 %v678, %v674
    %v1071 = vpack.c.b16 %v679, %v675
    %v1072 = vpack.c.b16 %v684, %v680
    %v1073 = vpack.c.b16 %v685, %v681
    %v1074 = vpack.c.b16 %v686, %v682
    %v1075 = vpack.c.b16 %v687, %v683
    %v1076 = vpack.c.b16 %v692, %v688
    %v1077 = vpack.c.b16 %v693, %v689
    %v1078 = vpack.c.b16 %v694, %v690
    %v1079 = vpack.c.b16 %v695, %v691
    %v1080 = vpack.c.b16 %v700, %v696
    %v1081 = vpack.c.b16 %v701, %v697
    %v1082 = vpack.c.b16 %v702, %v698
    %v1083 = vpack.c.b16 %v703, %v699
    %v1084 = vpack.c.b16 %v708, %v704
    %v1085 = vpack.c.b16 %v709, %v705
    %v1086 = vpack.c.b16 %v710, %v706
    %v1087 = vpack.c.b16 %v711, %v707
    %v1088 = vpack.c.b16 %v716, %v712
    %v1089 = vpack.c.b16 %v717, %v713
    %v1090 = vpack.c.b16 %v718, %v714
    %v1091 = vpack.c.b16 %v719, %v715
    %v1092 = vpack.c.b16 %v724, %v720
    %v1093 = vpack.c.b16 %v725, %v721
    %v1094 = vpack.c.b16 %v726, %v722
    %v1095 = vpack.c.b16 %v727, %v723
    %v1096 = vpack.c.b16 %v732, %v728
    %v1097 = vpack.c.b16 %v733, %v729
    %v1098 = vpack.c.b16 %v734, %v730
    %v1099 = vpack.c.b16 %v735, %v731
    %v1100 = vpack.c.b16 %v740, %v736
    %v1101 = vpack.c.b16 %v741, %v737
    %v1102 = vpack.c.b16 %v742, %v738
    %v1103 = vpack.c.b16 %v743, %v739
    %v1104 = vpack.c.b16 %v748, %v744
    %v1105 = vpack.c.b16 %v749, %v745
    %v1106 = vpack.c.b16 %v750, %v746
    %v1107 = vpack.c.b16 %v751, %v747
    %v1108 = vpack.c.b16 %v756, %v752
    %v1109 = vpack.c.b16 %v757, %v753
    %v1110 = vpack.c.b16 %v758, %v754
    %v1111 = vpack.c.b16 %v759, %v755
    %v1112 = vpack.c.b16 %v764, %v760
    %v1113 = vpack.c.b16 %v765, %v761
    %v1114 = vpack.c.b16 %v766, %v762
    %v1115 = vpack.c.b16 %v767, %v763
    %v1116 = vpack.c.b16 %v772, %v768
    %v1117 = vpack.c.b16 %v773, %v769
    %v1118 = vpack.c.b16 %v774, %v770
    %v1119 = vpack.c.b16 %v775, %v771
    %v1120 = vpack.c.b16 %v780, %v776
    %v1121 = vpack.c.b16 %v781, %v777
    %v1122 = vpack.c.b16 %v782, %v778
    %v1123 = vpack.c.b16 %v783, %v779
    %v1124 = vpack.c.b16 %v788, %v784
    %v1125 = vpack.c.b16 %v789, %v785
    %v1126 = vpack.c.b16 %v790, %v786
    %v1127 = vpack.c.b16 %v791, %v787
    %v1128 = vpack.c.b16 %v796, %v792
    %v1129 = vpack.c.b16 %v797, %v793
    %v1130 = vpack.c.b16 %v798, %v794
    %v1131 = vpack.c.b16 %v799, %v795
    %v1132 = vpack.c.b16 %v804, %v800
    %v1133 = vpack.c.b16 %v805, %v801
    %v1134 = vpack.c.b16 %v806, %v802
    %v1135 = vpack.c.b16 %v807, %v803
    %v1136 = vpack.c.b16 %v812, %v808
    %v1137 = vpack.c.b16 %v813, %v809
    %v1138 = vpack.c.b16 %v814, %v810
    %v1139 = vpack.c.b16 %v815, %v811
    %v1140 = vpack.c.b16 %v820, %v816
    %v1141 = vpack.c.b16 %v821, %v817
    %v1142 = vpack.c.b16 %v822, %v818
    %v1143 = vpack.c.b16 %v823, %v819
    %v1144 = vpack.c.b16 %v828, %v824
    %v1145 = vpack.c.b16 %v829, %v825
    %v1146 = vpack.c.b16 %v830, %v826
    %v1147 = vpack.c.b16 %v831, %v827
    %v1148 = vpack.c.b16 %v836, %v832
    %v1149 = vpack.c.b16 %v837, %v833
    %v1150 = vpack.c.b16 %v838, %v834
    %v1151 = vpack.c.b16 %v839, %v835
    %v1152 = vpack.c.b16 %v844, %v840
    %v1153 = vpack.c.b16 %v845, %v841
    %v1154 = vpack.c.b16 %v846, %v842
    %v1155 = vpack.c.b16 %v847, %v843
    %v1156 = vpack.c.b16 %v852, %v848
    %v1157 = vpack.c.b16 %v853, %v849
    %v1158 = vpack.c.b16 %v854, %v850
    %v1159 = vpack.c.b16 %v855, %v851
    %v1160 = vpack.c.b16 %v860, %v856
    %v1161 = vpack.c.b16 %v861, %v857
    %v1162 = vpack.c.b16 %v862, %v858
    %v1163 = vpack.c.b16 %v863, %v859
    %v1164 = vpack.c.b16 %v868, %v864
    %v1165 = vpack.c.b16 %v869, %v865
    %v1166 = vpack.c.b16 %v870, %v866
    %v1167 = vpack.c.b16 %v871, %v867
    %v1168 = vpack.c.b16 %v876, %v872
    %v1169 = vpack.c.b16 %v877, %v873
    %v1170 = vpack.c.b16 %v878, %v874
    %v1171 = vpack.c.b16 %v879, %v875
    %v1172 = vpack.c.b16 %v884, %v880
    %v1173 = vpack.c.b16 %v885, %v881
    %v1174 = vpack.c.b16 %v886, %v882
    %v1175 = vpack.c.b16 %v887, %v883
    %v1176 = vpack.c.b16 %v892, %v888
    %v1177 = vpack.c.b16 %v893, %v889
    %v1178 = vpack.c.b16 %v894, %v890
    %v1179 = vpack.c.b16 %v895, %v891
    %v1180 = vpack.c.b16 %v900, %v896
    %v1181 = vpack.c.b16 %v901, %v897
    %v1182 = vpack.c.b16 %v902, %v898
    %v1183 = vpack.c.b16 %v903, %v899
    %v1184 = vpack.c.b16 %v908, %v904
    %v1185 = vpack.c.b16 %v909, %v905
    %v1186 = vpack.c.b16 %v910, %v906
    %v1187 = vpack.c.b16 %v911, %v907
    %v1188 = vpack.c.b16 %v916, %v912
    %v1189 = vpack.c.b16 %v917, %v913
    %v1190 = vpack.c.b16 %v918, %v914
    %v1191 = vpack.c.b16 %v919, %v915
    %v1192 = vpack.c.b16 %v924, %v920
    %v1193 = vpack.c.b16 %v925, %v921
    %v1194 = vpack.c.b16 %v926, %v922
    %v1195 = vpack.c.b16 %v927, %v923
    %v1196 = vpack.c.b16 %v932, %v928
    %v1197 = vpack.c.b16 %v933, %v929
    %v1198 = vpack.c.b16 %v934, %v930
    %v1199 = vpack.c.b16 %v935, %v931
    %v1200 = vpack.c.b16 %v940, %v936
    %v1201 = vpack.c.b16 %v941, %v937
    %v1202 = vpack.c.b16 %v942, %v938
    %v1203 = vpack.c.b16 %v943, %v939
    %v1204 = vpack.c.b16 %v948, %v944
    %v1205 = vpack.c.b16 %v949, %v945
    %v1206 = vpack.c.b16 %v950, %v946
    %v1207 = vpack.c.b16 %v951, %v947
    %v1208 = vpack.c.b16 %v956, %v952
    %v1209 = vpack.c.b16 %v957, %v953
    %v1210 = vpack.c.b16 %v958, %v954
    %v1211 = vpack.c.b16 %v959, %v955
    %v1212 = vpack.c.b16 %v964, %v960
    %v1213 = vpack.c.b16 %v965, %v961
    %v1214 = vpack.c.b16 %v966, %v962
    %v1215 = vpack.c.b16 %v967, %v963
    %v1216 = vpack.c.b16 %v972, %v968
    %v1217 = vpack.c.b16 %v973, %v969
    %v1218 = vpack.c.b16 %v974, %v970
    %v1219 = vpack.c.b16 %v975, %v971
    %v1220 = vpack.c.b16 %v980, %v976
    %v1221 = vpack.c.b16 %v981, %v977
    %v1222 = vpack.c.b16 %v982, %v978
    %v1223 = vpack.c.b16 %v983, %v979
    %v1224 = vpack.c.b16 %v988, %v984
    %v1225 = vpack.c.b16 %v989, %v985
    %v1226 = vpack.c.b16 %v990, %v986
    %v1227 = vpack.c.b16 %v991, %v987
    %v1228 = vpack.c.b16 %v996, %v992
    %v1229 = vpack.c.b16 %v997, %v993
    %v1230 = vpack.c.b16 %v998, %v994
    %v1231 = vpack.c.b16 %v999, %v995
    %v1232 = vpack.c.b16 %v1004, %v1000
    %v1233 = vpack.c.b16 %v1005, %v1001
    %v1234 = vpack.c.b16 %v1006, %v1002
    %v1235 = vpack.c.b16 %v1007, %v1003
    %v1236 = vpack.c.b16 %v1012, %v1008
    %v1237 = vpack.c.b16 %v1013, %v1009
    %v1238 = vpack.c.b16 %v1014, %v1010
    %v1239 = vpack.c.b16 %v1015, %v1011
    %1464 = vmatprep.subr.bf16.mxu0 %v1017
    %1465 = vmatpush1.bf16.msra.mxu0 %v1016
    %1466 = vmatprep.subr.bf16.mxu0 %v1021
    %1467 = vmatpush1.bf16.msra.mxu0 %v1020
    %1468 = vmatprep.subr.bf16.mxu0 %v1025
    %1469 = vmatpush1.bf16.msra.mxu0 %v1024
    %1470 = vmatprep.subr.bf16.mxu0 %v1029
    %1471 = vmatpush1.bf16.msra.mxu0 %v1028
    %1472 = vmatprep.subr.bf16.mxu0 %v1033
    %1473 = vmatpush1.bf16.msra.mxu0 %v1032
    %1474 = vmatprep.subr.bf16.mxu0 %v1037
    %1475 = vmatpush1.bf16.msra.mxu0 %v1036
    %1476 = vmatprep.subr.bf16.mxu0 %v1041
    %1477 = vmatpush1.bf16.msra.mxu0 %v1040
    %1478 = vmatprep.subr.bf16.mxu0 %v1045
    %1479 = vmatpush1.bf16.msra.mxu0 %v1044
    %1480 = vmatprep.subr.bf16.mxu0 %v1049
    %1481 = vmatpush1.bf16.msra.mxu0 %v1048
    %1482 = vmatprep.subr.bf16.mxu0 %v1053
    %1483 = vmatpush1.bf16.msra.mxu0 %v1052
    %1484 = vmatprep.subr.bf16.mxu0 %v1057
    %1485 = vmatpush1.bf16.msra.mxu0 %v1056
    %1486 = vmatprep.subr.bf16.mxu0 %v1061
    %1487 = vmatpush1.bf16.msra.mxu0 %v1060
    %1488 = vmatprep.subr.bf16.mxu0 %v1065
    %1489 = vmatpush1.bf16.msra.mxu0 %v1064
    %1490 = vmatprep.subr.bf16.mxu0 %v1069
    %1491 = vmatpush1.bf16.msra.mxu0 %v1068
    %1492 = vmatprep.subr.bf16.mxu0 %v1073
    %1493 = vmatpush1.bf16.msra.mxu0 %v1072
    %1494 = vmatprep.subr.bf16.mxu0 %v1077
    %1495 = vmatpush1.bf16.msra.mxu0 %v1076
    %1496 = vmatprep.mubr.bf16.mxu0 %v92
    %1497 = vmatmul.mubr.bf16.gmra.mrb[0].mxu0 %v91
    %v1498 = vpop.f32.mrb[0].mxu0
    %v1499 = vadd.f32 %v327, %v1498
    %v1500 = vpop.f32.mrb[0].mxu0
    %v1501 = vadd.f32 %v331, %v1500
    %v1502 = vpop.f32.mrb[0].mxu0
    %v1503 = vpop.f32.mrb[0].mxu0
    %1504 = vdwg.mxu0
    %1505 = vmatprep.subr.bf16.mxu0 %v1081
    %1506 = vmatpush1.bf16.msra.mxu0 %v1080
    %1507 = vmatprep.subr.bf16.mxu0 %v1085
    %1508 = vmatpush1.bf16.msra.mxu0 %v1084
    %1509 = vmatprep.subr.bf16.mxu0 %v1089
    %1510 = vmatpush1.bf16.msra.mxu0 %v1088
    %1511 = vmatprep.subr.bf16.mxu0 %v1093
    %1512 = vmatpush1.bf16.msra.mxu0 %v1092
    %1513 = vmatprep.subr.bf16.mxu0 %v1097
    %1514 = vmatpush1.bf16.msra.mxu0 %v1096
    %1515 = vmatprep.subr.bf16.mxu0 %v1101
    %1516 = vmatpush1.bf16.msra.mxu0 %v1100
    %1517 = vmatprep.subr.bf16.mxu0 %v1105
    %1518 = vmatpush1.bf16.msra.mxu0 %v1104
    %1519 = vmatprep.subr.bf16.mxu0 %v1109
    %1520 = vmatpush1.bf16.msra.mxu0 %v1108
    %1521 = vmatprep.subr.bf16.mxu0 %v1113
    %1522 = vmatpush1.bf16.msra.mxu0 %v1112
    %1523 = vmatprep.subr.bf16.mxu0 %v1117
    %1524 = vmatpush1.bf16.msra.mxu0 %v1116
    %1525 = vmatprep.subr.bf16.mxu0 %v1121
    %1526 = vmatpush1.bf16.msra.mxu0 %v1120
    %1527 = vmatprep.subr.bf16.mxu0 %v1125
    %1528 = vmatpush1.bf16.msra.mxu0 %v1124
    %1529 = vmatprep.subr.bf16.mxu0 %v1129
    %1530 = vmatpush1.bf16.msra.mxu0 %v1128
    %1531 = vmatprep.subr.bf16.mxu0 %v1133
    %1532 = vmatpush1.bf16.msra.mxu0 %v1132
    %1533 = vmatprep.subr.bf16.mxu0 %v1137
    %1534 = vmatpush1.bf16.msra.mxu0 %v1136
    %1535 = vmatprep.subr.bf16.mxu0 %v1141
    %1536 = vmatpush1.bf16.msra.mxu0 %v1140
    %1537 = vmatprep.mubr.bf16.mxu0 %v94
    %1538 = vmatmul.mubr.bf16.gmra.mrb[0].mxu0 %v93
    %v1539 = vpop.f32.mrb[0].mxu0
    %v1540 = vadd.f32 %v1499, %v1539
    %v1541 = vpop.f32.mrb[0].mxu0
    %v1542 = vadd.f32 %v1501, %v1541
    %v1543 = vpop.f32.mrb[0].mxu0
    %v1544 = vpop.f32.mrb[0].mxu0
    %1545 = vdwg.mxu0
    %1546 = vmatprep.subr.bf16.mxu0 %v1145
    %1547 = vmatpush1.bf16.msra.mxu0 %v1144
    %1548 = vmatprep.subr.bf16.mxu0 %v1149
    %1549 = vmatpush1.bf16.msra.mxu0 %v1148
    %1550 = vmatprep.subr.bf16.mxu0 %v1153
    %1551 = vmatpush1.bf16.msra.mxu0 %v1152
    %1552 = vmatprep.subr.bf16.mxu0 %v1157
    %1553 = vmatpush1.bf16.msra.mxu0 %v1156
    %1554 = vmatprep.subr.bf16.mxu0 %v1161
    %1555 = vmatpush1.bf16.msra.mxu0 %v1160
    %1556 = vmatprep.subr.bf16.mxu0 %v1165
    %1557 = vmatpush1.bf16.msra.mxu0 %v1164
    %1558 = vmatprep.subr.bf16.mxu0 %v1169
    %1559 = vmatpush1.bf16.msra.mxu0 %v1168
    %1560 = vmatprep.subr.bf16.mxu0 %v1173
    %1561 = vmatpush1.bf16.msra.mxu0 %v1172
    %1562 = vmatprep.subr.bf16.mxu0 %v1177
    %1563 = vmatpush1.bf16.msra.mxu0 %v1176
    %1564 = vmatprep.subr.bf16.mxu0 %v1181
    %1565 = vmatpush1.bf16.msra.mxu0 %v1180
    %1566 = vmatprep.subr.bf16.mxu0 %v1185
    %1567 = vmatpush1.bf16.msra.mxu0 %v1184
    %1568 = vmatprep.subr.bf16.mxu0 %v1189
    %1569 = vmatpush1.bf16.msra.mxu0 %v1188
    %1570 = vmatprep.subr.bf16.mxu0 %v1193
    %1571 = vmatpush1.bf16.msra.mxu0 %v1192
    %1572 = vmatprep.subr.bf16.mxu0 %v1197
    %1573 = vmatpush1.bf16.msra.mxu0 %v1196
    %1574 = vmatprep.subr.bf16.mxu0 %v1201
    %1575 = vmatpush1.bf16.msra.mxu0 %v1200
    %1576 = vmatprep.subr.bf16.mxu0 %v1205
    %1577 = vmatpush1.bf16.msra.mxu0 %v1204
    %1578 = vmatprep.mubr.bf16.mxu0 %v96
    %1579 = vmatmul.mubr.bf16.gmra.mrb[0].mxu0 %v95
    %v1580 = vpop.f32.mrb[0].mxu0
    %v1581 = vadd.f32 %v1540, %v1580
    %v1582 = vpop.f32.mrb[0].mxu0
    %v1583 = vadd.f32 %v1542, %v1582
    %v1584 = vpop.f32.mrb[0].mxu0
    %v1585 = vpop.f32.mrb[0].mxu0
    %1586 = vdwg.mxu0
    %1587 = vmatprep.subr.bf16.mxu0 %v1209
    %1588 = vmatpush1.bf16.msra.mxu0 %v1208
    %1589 = vmatprep.subr.bf16.mxu0 %v1213
    %1590 = vmatpush1.bf16.msra.mxu0 %v1212
    %1591 = vmatprep.subr.bf16.mxu0 %v1217
    %1592 = vmatpush1.bf16.msra.mxu0 %v1216
    %1593 = vmatprep.subr.bf16.mxu0 %v1221
    %1594 = vmatpush1.bf16.msra.mxu0 %v1220
    %1595 = vmatprep.subr.bf16.mxu0 %v1225
    %1596 = vmatpush1.bf16.msra.mxu0 %v1224
    %1597 = vmatprep.subr.bf16.mxu0 %v1229
    %1598 = vmatpush1.bf16.msra.mxu0 %v1228
    %1599 = vmatprep.subr.bf16.mxu0 %v1233
    %1600 = vmatpush1.bf16.msra.mxu0 %v1232
    %1601 = vmatprep.subr.bf16.mxu0 %v1237
    %1602 = vmatpush1.bf16.msra.mxu0 %v1236
    %1603 = vmatprep.subr.bf16.mxu0 0
    %1604 = vmatpush1.bf16.msra.mxu0 0
    %1605 = vmatprep.subr.bf16.mxu0 0
    %1606 = vmatpush1.bf16.msra.mxu0 0
    %1607 = vmatprep.subr.bf16.mxu0 0
    %1608 = vmatpush1.bf16.msra.mxu0 0
    %1609 = vmatprep.subr.bf16.mxu0 0
    %1610 = vmatpush1.bf16.msra.mxu0 0
    %1611 = vmatprep.subr.bf16.mxu0 0
    %1612 = vmatpush1.bf16.msra.mxu0 0
    %1613 = vmatprep.subr.bf16.mxu0 0
    %1614 = vmatpush1.bf16.msra.mxu0 0
    %1615 = vmatprep.subr.bf16.mxu0 0
    %1616 = vmatpush1.bf16.msra.mxu0 0
    %1617 = vmatprep.subr.bf16.mxu0 0
    %1618 = vmatpush1.bf16.msra.mxu0 0
    %1619 = vmatprep.mubr.bf16.mxu0 0
    %1620 = vmatmul.mubr.bf16.gmra.mrb[0].mxu0 %v97
    %v1621 = vpop.f32.mrb[0].mxu0
    %v1622 = vadd.f32 %v1581, %v1621
    %v1623 = vpop.f32.mrb[0].mxu0
    %v1624 = vadd.f32 %v1583, %v1623
    %v1625 = vpop.f32.mrb[0].mxu0
    %v1626 = vpop.f32.mrb[0].mxu0
    %1627 = vdwg.mxu0
    %1628 = vmatprep.subr.bf16.mxu0 %v1019
    %1629 = vmatpush1.bf16.msra.mxu0 %v1018
    %1630 = vmatprep.subr.bf16.mxu0 %v1023
    %1631 = vmatpush1.bf16.msra.mxu0 %v1022
    %1632 = vmatprep.subr.bf16.mxu0 %v1027
    %1633 = vmatpush1.bf16.msra.mxu0 %v1026
    %1634 = vmatprep.subr.bf16.mxu0 %v1031
    %1635 = vmatpush1.bf16.msra.mxu0 %v1030
    %1636 = vmatprep.subr.bf16.mxu0 %v1035
    %1637 = vmatpush1.bf16.msra.mxu0 %v1034
    %1638 = vmatprep.subr.bf16.mxu0 %v1039
    %1639 = vmatpush1.bf16.msra.mxu0 %v1038
    %1640 = vmatprep.subr.bf16.mxu0 %v1043
    %1641 = vmatpush1.bf16.msra.mxu0 %v1042
    %1642 = vmatprep.subr.bf16.mxu0 %v1047
    %1643 = vmatpush1.bf16.msra.mxu0 %v1046
    %1644 = vmatprep.subr.bf16.mxu0 %v1051
    %1645 = vmatpush1.bf16.msra.mxu0 %v1050
    %1646 = vmatprep.subr.bf16.mxu0 %v1055
    %1647 = vmatpush1.bf16.msra.mxu0 %v1054
    %1648 = vmatprep.subr.bf16.mxu0 %v1059
    %1649 = vmatpush1.bf16.msra.mxu0 %v1058
    %1650 = vmatprep.subr.bf16.mxu0 %v1063
    %1651 = vmatpush1.bf16.msra.mxu0 %v1062
    %1652 = vmatprep.subr.bf16.mxu0 %v1067
    %1653 = vmatpush1.bf16.msra.mxu0 %v1066
    %1654 = vmatprep.subr.bf16.mxu0 %v1071
    %1655 = vmatpush1.bf16.msra.mxu0 %v1070
    %1656 = vmatprep.subr.bf16.mxu0 %v1075
    %1657 = vmatpush1.bf16.msra.mxu0 %v1074
    %1658 = vmatprep.subr.bf16.mxu0 %v1079
    %1659 = vmatpush1.bf16.msra.mxu0 %v1078
    %1660 = vmatprep.mubr.bf16.mxu0 %v92
    %1661 = vmatmul.mubr.bf16.gmra.mrb[0].mxu0 %v91
    %v1662 = vpop.f32.mrb[0].mxu0
    %v1663 = vadd.f32 %v335, %v1662
    %v1664 = vpop.f32.mrb[0].mxu0
    %v1665 = vadd.f32 %v339, %v1664
    %v1666 = vpop.f32.mrb[0].mxu0
    %v1667 = vpop.f32.mrb[0].mxu0
    %1668 = vdwg.mxu0
    %1669 = vmatprep.subr.bf16.mxu0 %v1083
    %1670 = vmatpush1.bf16.msra.mxu0 %v1082
    %1671 = vmatprep.subr.bf16.mxu0 %v1087
    %1672 = vmatpush1.bf16.msra.mxu0 %v1086
    %1673 = vmatprep.subr.bf16.mxu0 %v1091
    %1674 = vmatpush1.bf16.msra.mxu0 %v1090
    %1675 = vmatprep.subr.bf16.mxu0 %v1095
    %1676 = vmatpush1.bf16.msra.mxu0 %v1094
    %1677 = vmatprep.subr.bf16.mxu0 %v1099
    %1678 = vmatpush1.bf16.msra.mxu0 %v1098
    %1679 = vmatprep.subr.bf16.mxu0 %v1103
    %1680 = vmatpush1.bf16.msra.mxu0 %v1102
    %1681 = vmatprep.subr.bf16.mxu0 %v1107
    %1682 = vmatpush1.bf16.msra.mxu0 %v1106
    %1683 = vmatprep.subr.bf16.mxu0 %v1111
    %1684 = vmatpush1.bf16.msra.mxu0 %v1110
    %1685 = vmatprep.subr.bf16.mxu0 %v1115
    %1686 = vmatpush1.bf16.msra.mxu0 %v1114
    %1687 = vmatprep.subr.bf16.mxu0 %v1119
    %1688 = vmatpush1.bf16.msra.mxu0 %v1118
    %1689 = vmatprep.subr.bf16.mxu0 %v1123
    %1690 = vmatpush1.bf16.msra.mxu0 %v1122
    %1691 = vmatprep.subr.bf16.mxu0 %v1127
    %1692 = vmatpush1.bf16.msra.mxu0 %v1126
    %1693 = vmatprep.subr.bf16.mxu0 %v1131
    %1694 = vmatpush1.bf16.msra.mxu0 %v1130
    %1695 = vmatprep.subr.bf16.mxu0 %v1135
    %1696 = vmatpush1.bf16.msra.mxu0 %v1134
    %1697 = vmatprep.subr.bf16.mxu0 %v1139
    %1698 = vmatpush1.bf16.msra.mxu0 %v1138
    %1699 = vmatprep.subr.bf16.mxu0 %v1143
    %1700 = vmatpush1.bf16.msra.mxu0 %v1142
    %1701 = vmatprep.mubr.bf16.mxu0 %v94
    %1702 = vmatmul.mubr.bf16.gmra.mrb[0].mxu0 %v93
    %v1703 = vpop.f32.mrb[0].mxu0
    %v1704 = vadd.f32 %v1663, %v1703
    %v1705 = vpop.f32.mrb[0].mxu0
    %v1706 = vadd.f32 %v1665, %v1705
    %v1707 = vpop.f32.mrb[0].mxu0
    %v1708 = vpop.f32.mrb[0].mxu0
    %1709 = vdwg.mxu0
    %1710 = vmatprep.subr.bf16.mxu0 %v1147
    %1711 = vmatpush1.bf16.msra.mxu0 %v1146
    %1712 = vmatprep.subr.bf16.mxu0 %v1151
    %1713 = vmatpush1.bf16.msra.mxu0 %v1150
    %1714 = vmatprep.subr.bf16.mxu0 %v1155
    %1715 = vmatpush1.bf16.msra.mxu0 %v1154
    %1716 = vmatprep.subr.bf16.mxu0 %v1159
    %1717 = vmatpush1.bf16.msra.mxu0 %v1158
    %1718 = vmatprep.subr.bf16.mxu0 %v1163
    %1719 = vmatpush1.bf16.msra.mxu0 %v1162
    %1720 = vmatprep.subr.bf16.mxu0 %v1167
    %1721 = vmatpush1.bf16.msra.mxu0 %v1166
    %1722 = vmatprep.subr.bf16.mxu0 %v1171
    %1723 = vmatpush1.bf16.msra.mxu0 %v1170
    %1724 = vmatprep.subr.bf16.mxu0 %v1175
    %1725 = vmatpush1.bf16.msra.mxu0 %v1174
    %1726 = vmatprep.subr.bf16.mxu0 %v1179
    %1727 = vmatpush1.bf16.msra.mxu0 %v1178
    %1728 = vmatprep.subr.bf16.mxu0 %v1183
    %1729 = vmatpush1.bf16.msra.mxu0 %v1182
    %1730 = vmatprep.subr.bf16.mxu0 %v1187
    %1731 = vmatpush1.bf16.msra.mxu0 %v1186
    %1732 = vmatprep.subr.bf16.mxu0 %v1191
    %1733 = vmatpush1.bf16.msra.mxu0 %v1190
    %1734 = vmatprep.subr.bf16.mxu0 %v1195
    %1735 = vmatpush1.bf16.msra.mxu0 %v1194
    %1736 = vmatprep.subr.bf16.mxu0 %v1199
    %1737 = vmatpush1.bf16.msra.mxu0 %v1198
    %1738 = vmatprep.subr.bf16.mxu0 %v1203
    %1739 = vmatpush1.bf16.msra.mxu0 %v1202
    %1740 = vmatprep.subr.bf16.mxu0 %v1207
    %1741 = vmatpush1.bf16.msra.mxu0 %v1206
    %1742 = vmatprep.mubr.bf16.mxu0 %v96
    %1743 = vmatmul.mubr.bf16.gmra.mrb[0].mxu0 %v95
    %v1744 = vpop.f32.mrb[0].mxu0
    %v1745 = vadd.f32 %v1704, %v1744
    %v1746 = vpop.f32.mrb[0].mxu0
    %v1747 = vadd.f32 %v1706, %v1746
    %v1748 = vpop.f32.mrb[0].mxu0
    %v1749 = vpop.f32.mrb[0].mxu0
    %1750 = vdwg.mxu0
    %1751 = vmatprep.subr.bf16.mxu0 %v1211
    %1752 = vmatpush1.bf16.msra.mxu0 %v1210
    %1753 = vmatprep.subr.bf16.mxu0 %v1215
    %1754 = vmatpush1.bf16.msra.mxu0 %v1214
    %1755 = vmatprep.subr.bf16.mxu0 %v1219
    %1756 = vmatpush1.bf16.msra.mxu0 %v1218
    %1757 = vmatprep.subr.bf16.mxu0 %v1223
    %1758 = vmatpush1.bf16.msra.mxu0 %v1222
    %1759 = vmatprep.subr.bf16.mxu0 %v1227
    %1760 = vmatpush1.bf16.msra.mxu0 %v1226
    %1761 = vmatprep.subr.bf16.mxu0 %v1231
    %1762 = vmatpush1.bf16.msra.mxu0 %v1230
    %1763 = vmatprep.subr.bf16.mxu0 %v1235
    %1764 = vmatpush1.bf16.msra.mxu0 %v1234
    %1765 = vmatprep.subr.bf16.mxu0 %v1239
    %1766 = vmatpush1.bf16.msra.mxu0 %v1238
    %1767 = vmatprep.subr.bf16.mxu0 0
    %1768 = vmatpush1.bf16.msra.mxu0 0
    %1769 = vmatprep.subr.bf16.mxu0 0
    %1770 = vmatpush1.bf16.msra.mxu0 0
    %1771 = vmatprep.subr.bf16.mxu0 0
    %1772 = vmatpush1.bf16.msra.mxu0 0
    %1773 = vmatprep.subr.bf16.mxu0 0
    %1774 = vmatpush1.bf16.msra.mxu0 0
    %1775 = vmatprep.subr.bf16.mxu0 0
    %1776 = vmatpush1.bf16.msra.mxu0 0
    %1777 = vmatprep.subr.bf16.mxu0 0
    %1778 = vmatpush1.bf16.msra.mxu0 0
    %1779 = vmatprep.subr.bf16.mxu0 0
    %1780 = vmatpush1.bf16.msra.mxu0 0
    %1781 = vmatprep.subr.bf16.mxu0 0
    %1782 = vmatpush1.bf16.msra.mxu0 0
    %1783 = vmatprep.mubr.bf16.mxu0 0
    %1784 = vmatmul.mubr.bf16.gmra.mrb[0].mxu0 %v97
    %v1785 = vpop.f32.mrb[0].mxu0
    %v1786 = vadd.f32 %v1745, %v1785
    %v1787 = vpop.f32.mrb[0].mxu0
    %v1788 = vadd.f32 %v1747, %v1787
    %v1789 = vpop.f32.mrb[0].mxu0
    %v1790 = vpop.f32.mrb[0].mxu0
    %1791 = vdwg.mxu0
    %v1792 = vmax.f32 %v1622, 0.0
    %v1793 = vmax.f32 %v1624, 0.0
    %v1794 = vmax.f32 %v1786, 0.0
    %v1795 = vmax.f32 %v1788, 0.0
    %v1796 = vpack.c.bf16 %v1792, %v1792
    %v1797 = vpack.c.bf16 %v1793, %v1793
    %v1798 = vpack.c.bf16 %v1794, %v1794
    %v1799 = vpack.c.bf16 %v1795, %v1795
    %v1800 = vld [vmem:[#allocation7] sm:$0xff]
    %v1801 = vld [vmem:[#allocation7 + $0x8] sm:$0xff]
    %v1802 = vld [vmem:[#allocation7 + $0x10] sm:$0xff]
    %v1803 = vld [vmem:[#allocation7 + $0x18] sm:$0xff]
    %v1804 = vld [vmem:[#allocation7 + $0x20] sm:$0xff]
    %v1805 = vld [vmem:[#allocation7 + $0x28] sm:$0xff]
    %v1806 = vld [vmem:[#allocation7 + $0x30] sm:$0xff]
    %v1807 = vld [vmem:[#allocation7 + $0x38] sm:$0xff]
    %v1808 = vld [vmem:[#allocation7 + $0x40] sm:$0xff]
    %v1809 = vld [vmem:[#allocation7 + $0x48] sm:$0xff]
    %v1810 = vld [vmem:[#allocation7 + $0x50] sm:$0xff]
    %v1811 = vld [vmem:[#allocation7 + $0x58] sm:$0xff]
    %v1812 = vld [vmem:[#allocation7 + $0x60] sm:$0xff]
    %v1813 = vld [vmem:[#allocation7 + $0x68] sm:$0xff]
    %v1814 = vld [vmem:[#allocation7 + $0x70] sm:$0xff]
    %v1815 = vld [vmem:[#allocation7 + $0x78] sm:$0xff]
    %v1816 = vld [vmem:[#allocation7 + $0x80] sm:$0xff]
    %v1817 = vld [vmem:[#allocation7 + $0x88] sm:$0xff]
    %v1818 = vld [vmem:[#allocation7 + $0x90] sm:$0xff]
    %v1819 = vld [vmem:[#allocation7 + $0x98] sm:$0xff]
    %v1820 = vld [vmem:[#allocation7 + $0xa0] sm:$0xff]
    %v1821 = vld [vmem:[#allocation7 + $0xa8] sm:$0xff]
    %v1822 = vld [vmem:[#allocation7 + $0xb0] sm:$0xff]
    %v1823 = vld [vmem:[#allocation7 + $0xb8] sm:$0xff]
    %v1824 = vld [vmem:[#allocation7 + $0xc0] sm:$0xff]
    %v1825 = vld [vmem:[#allocation7 + $0xc8] sm:$0xff]
    %v1826 = vld [vmem:[#allocation7 + $0xd0] sm:$0xff]
    %v1827 = vld [vmem:[#allocation7 + $0xd8] sm:$0xff]
    %v1828 = vld [vmem:[#allocation7 + $0xe0] sm:$0xff]
    %v1829 = vld [vmem:[#allocation7 + $0xe8] sm:$0xff]
    %v1830 = vld [vmem:[#allocation7 + $0xf0] sm:$0xff]
    %v1831 = vld [vmem:[#allocation7 + $0xf8] sm:$0xff]
    %v1832 = vld [vmem:[#allocation7 + $0x100] sm:$0xff]
    %v1833 = vld [vmem:[#allocation7 + $0x108] sm:$0xff]
    %v1834 = vld [vmem:[#allocation7 + $0x110] sm:$0xff]
    %v1835 = vld [vmem:[#allocation7 + $0x118] sm:$0xff]
    %v1836 = vld [vmem:[#allocation7 + $0x120] sm:$0xff]
    %v1837 = vld [vmem:[#allocation7 + $0x128] sm:$0xff]
    %v1838 = vld [vmem:[#allocation7 + $0x130] sm:$0xff]
    %v1839 = vld [vmem:[#allocation7 + $0x138] sm:$0xff]
    %v1840 = vld [vmem:[#allocation7 + $0x140] sm:$0xff]
    %v1841 = vld [vmem:[#allocation7 + $0x148] sm:$0xff]
    %v1842 = vld [vmem:[#allocation7 + $0x150] sm:$0xff]
    %v1843 = vld [vmem:[#allocation7 + $0x158] sm:$0xff]
    %v1844 = vld [vmem:[#allocation7 + $0x160] sm:$0xff]
    %v1845 = vld [vmem:[#allocation7 + $0x168] sm:$0xff]
    %v1846 = vld [vmem:[#allocation7 + $0x170] sm:$0xff]
    %v1847 = vld [vmem:[#allocation7 + $0x178] sm:$0xff]
    %v1848 = vld [vmem:[#allocation7 + $0x180] sm:$0xff]
    %v1849 = vld [vmem:[#allocation7 + $0x188] sm:$0xff]
    %v1850 = vld [vmem:[#allocation7 + $0x190] sm:$0xff]
    %v1851 = vld [vmem:[#allocation7 + $0x198] sm:$0xff]
    %v1852 = vld [vmem:[#allocation7 + $0x1a0] sm:$0xff]
    %v1853 = vld [vmem:[#allocation7 + $0x1a8] sm:$0xff]
    %v1854 = vld [vmem:[#allocation7 + $0x1b0] sm:$0xff]
    %v1855 = vld [vmem:[#allocation7 + $0x1b8] sm:$0xff]
    %v1856 = vld [vmem:[#allocation7 + $0x1c0] sm:$0xff]
    %v1857 = vld [vmem:[#allocation7 + $0x1c8] sm:$0xff]
    %v1858 = vld [vmem:[#allocation7 + $0x1d0] sm:$0xff]
    %v1859 = vld [vmem:[#allocation7 + $0x1d8] sm:$0xff]
    %v1860 = vld [vmem:[#allocation7 + $0x1e0] sm:$0xff]
    %v1861 = vld [vmem:[#allocation7 + $0x1e8] sm:$0xff]
    %v1862 = vld [vmem:[#allocation7 + $0x1f0] sm:$0xff]
    %v1863 = vld [vmem:[#allocation7 + $0x1f8] sm:$0xff]
    %v1864 = vld [vmem:[#allocation7 + $0x200] sm:$0xff]
    %v1865 = vld [vmem:[#allocation7 + $0x208] sm:$0xff]
    %v1866 = vld [vmem:[#allocation7 + $0x210] sm:$0xff]
    %v1867 = vld [vmem:[#allocation7 + $0x218] sm:$0xff]
    %v1868 = vld [vmem:[#allocation7 + $0x220] sm:$0xff]
    %v1869 = vld [vmem:[#allocation7 + $0x228] sm:$0xff]
    %v1870 = vld [vmem:[#allocation7 + $0x230] sm:$0xff]
    %v1871 = vld [vmem:[#allocation7 + $0x238] sm:$0xff]
    %v1872 = vld [vmem:[#allocation7 + $0x240] sm:$0xff]
    %v1873 = vld [vmem:[#allocation7 + $0x248] sm:$0xff]
    %v1874 = vld [vmem:[#allocation7 + $0x250] sm:$0xff]
    %v1875 = vld [vmem:[#allocation7 + $0x258] sm:$0xff]
    %v1876 = vld [vmem:[#allocation7 + $0x260] sm:$0xff]
    %v1877 = vld [vmem:[#allocation7 + $0x268] sm:$0xff]
    %v1878 = vld [vmem:[#allocation7 + $0x270] sm:$0xff]
    %v1879 = vld [vmem:[#allocation7 + $0x278] sm:$0xff]
    %v1880 = vld [vmem:[#allocation7 + $0x280] sm:$0xff]
    %v1881 = vld [vmem:[#allocation7 + $0x288] sm:$0xff]
    %v1882 = vld [vmem:[#allocation7 + $0x290] sm:$0xff]
    %v1883 = vld [vmem:[#allocation7 + $0x298] sm:$0xff]
    %v1884 = vld [vmem:[#allocation7 + $0x2a0] sm:$0xff]
    %v1885 = vld [vmem:[#allocation7 + $0x2a8] sm:$0xff]
    %v1886 = vld [vmem:[#allocation7 + $0x2b0] sm:$0xff]
    %v1887 = vld [vmem:[#allocation7 + $0x2b8] sm:$0xff]
    %v1888 = vld [vmem:[#allocation7 + $0x2c0] sm:$0xff]
    %v1889 = vld [vmem:[#allocation7 + $0x2c8] sm:$0xff]
    %v1890 = vld [vmem:[#allocation7 + $0x2d0] sm:$0xff]
    %v1891 = vld [vmem:[#allocation7 + $0x2d8] sm:$0xff]
    %v1892 = vld [vmem:[#allocation7 + $0x2e0] sm:$0xff]
    %v1893 = vld [vmem:[#allocation7 + $0x2e8] sm:$0xff]
    %v1894 = vld [vmem:[#allocation7 + $0x2f0] sm:$0xff]
    %v1895 = vld [vmem:[#allocation7 + $0x2f8] sm:$0xff]
    %v1896 = vld [vmem:[#allocation7 + $0x300] sm:$0xff]
    %v1897 = vld [vmem:[#allocation7 + $0x308] sm:$0xff]
    %v1898 = vld [vmem:[#allocation7 + $0x310] sm:$0xff]
    %v1899 = vld [vmem:[#allocation7 + $0x318] sm:$0xff]
    %v1900 = vld [vmem:[#allocation7 + $0x320] sm:$0xff]
    %v1901 = vld [vmem:[#allocation7 + $0x328] sm:$0xff]
    %v1902 = vld [vmem:[#allocation7 + $0x330] sm:$0xff]
    %v1903 = vld [vmem:[#allocation7 + $0x338] sm:$0xff]
    %v1904 = vld [vmem:[#allocation7 + $0x340] sm:$0xff]
    %v1905 = vld [vmem:[#allocation7 + $0x348] sm:$0xff]
    %v1906 = vld [vmem:[#allocation7 + $0x350] sm:$0xff]
    %v1907 = vld [vmem:[#allocation7 + $0x358] sm:$0xff]
    %v1908 = vld [vmem:[#allocation7 + $0x360] sm:$0xff]
    %v1909 = vld [vmem:[#allocation7 + $0x368] sm:$0xff]
    %v1910 = vld [vmem:[#allocation7 + $0x370] sm:$0xff]
    %v1911 = vld [vmem:[#allocation7 + $0x378] sm:$0xff]
    %v1912 = vld [vmem:[#allocation7 + $0x380] sm:$0xff]
    %v1913 = vld [vmem:[#allocation7 + $0x388] sm:$0xff]
    %v1914 = vld [vmem:[#allocation7 + $0x390] sm:$0xff]
    %v1915 = vld [vmem:[#allocation7 + $0x398] sm:$0xff]
    %v1916 = vld [vmem:[#allocation7 + $0x3a0] sm:$0xff]
    %v1917 = vld [vmem:[#allocation7 + $0x3a8] sm:$0xff]
    %v1918 = vld [vmem:[#allocation7 + $0x3b0] sm:$0xff]
    %v1919 = vld [vmem:[#allocation7 + $0x3b8] sm:$0xff]
    %v1920 = vld [vmem:[#allocation7 + $0x3c0] sm:$0xff]
    %v1921 = vld [vmem:[#allocation7 + $0x3c8] sm:$0xff]
    %v1922 = vld [vmem:[#allocation7 + $0x3d0] sm:$0xff]
    %v1923 = vld [vmem:[#allocation7 + $0x3d8] sm:$0xff]
    %v1924 = vld [vmem:[#allocation7 + $0x3e0] sm:$0xff]
    %v1925 = vld [vmem:[#allocation7 + $0x3e8] sm:$0xff]
    %v1926 = vld [vmem:[#allocation7 + $0x3f0] sm:$0xff]
    %v1927 = vld [vmem:[#allocation7 + $0x3f8] sm:$0xff]
    %v1928 = vld [vmem:[%s4] sm:$0xf]
    %v1930 = vlaneseq
    %v1931 = vshrl.u32 %v1930, 7
    %v1932 = vsub.s32 0, %v1931
    %v1933 = vrot.slane %v1928, %v1932
    %v1934 = vlaneseq
    %v1935 = vshrl.u32 %v1934, 7
    %v1936 = vsub.s32 1, %v1935
    %v1937 = vrot.slane %v1928, %v1936
    %v1938 = vlaneseq
    %v1939 = vshrl.u32 %v1938, 7
    %v1940 = vsub.s32 2, %v1939
    %v1941 = vrot.slane %v1928, %v1940
    %v1942 = vlaneseq
    %v1943 = vshrl.u32 %v1942, 7
    %v1944 = vsub.s32 3, %v1943
    %v1945 = vrot.slane %v1928, %v1944
    %v2078 = vunpack.c.l.b16 %v1800
    %v2079 = vunpack.c.h.b16 %v1800
    %v2080 = vunpack.c.l.b16 %v1801
    %v2081 = vunpack.c.h.b16 %v1801
    %v2082 = vunpack.c.l.b16 %v1802
    %v2083 = vunpack.c.h.b16 %v1802
    %v2084 = vunpack.c.l.b16 %v1803
    %v2085 = vunpack.c.h.b16 %v1803
    %v2086 = vunpack.c.l.b16 %v1804
    %v2087 = vunpack.c.h.b16 %v1804
    %v2088 = vunpack.c.l.b16 %v1805
    %v2089 = vunpack.c.h.b16 %v1805
    %v2090 = vunpack.c.l.b16 %v1806
    %v2091 = vunpack.c.h.b16 %v1806
    %v2092 = vunpack.c.l.b16 %v1807
    %v2093 = vunpack.c.h.b16 %v1807
    %v2094 = vunpack.c.l.b16 %v1808
    %v2095 = vunpack.c.h.b16 %v1808
    %v2096 = vunpack.c.l.b16 %v1809
    %v2097 = vunpack.c.h.b16 %v1809
    %v2098 = vunpack.c.l.b16 %v1810
    %v2099 = vunpack.c.h.b16 %v1810
    %v2100 = vunpack.c.l.b16 %v1811
    %v2101 = vunpack.c.h.b16 %v1811
    %v2102 = vunpack.c.l.b16 %v1812
    %v2103 = vunpack.c.h.b16 %v1812
    %v2104 = vunpack.c.l.b16 %v1813
    %v2105 = vunpack.c.h.b16 %v1813
    %v2106 = vunpack.c.l.b16 %v1814
    %v2107 = vunpack.c.h.b16 %v1814
    %v2108 = vunpack.c.l.b16 %v1815
    %v2109 = vunpack.c.h.b16 %v1815
    %v2110 = vunpack.c.l.b16 %v1816
    %v2111 = vunpack.c.h.b16 %v1816
    %v2112 = vunpack.c.l.b16 %v1817
    %v2113 = vunpack.c.h.b16 %v1817
    %v2114 = vunpack.c.l.b16 %v1818
    %v2115 = vunpack.c.h.b16 %v1818
    %v2116 = vunpack.c.l.b16 %v1819
    %v2117 = vunpack.c.h.b16 %v1819
    %v2118 = vunpack.c.l.b16 %v1820
    %v2119 = vunpack.c.h.b16 %v1820
    %v2120 = vunpack.c.l.b16 %v1821
    %v2121 = vunpack.c.h.b16 %v1821
    %v2122 = vunpack.c.l.b16 %v1822
    %v2123 = vunpack.c.h.b16 %v1822
    %v2124 = vunpack.c.l.b16 %v1823
    %v2125 = vunpack.c.h.b16 %v1823
    %v2126 = vunpack.c.l.b16 %v1824
    %v2127 = vunpack.c.h.b16 %v1824
    %v2128 = vunpack.c.l.b16 %v1825
    %v2129 = vunpack.c.h.b16 %v1825
    %v2130 = vunpack.c.l.b16 %v1826
    %v2131 = vunpack.c.h.b16 %v1826
    %v2132 = vunpack.c.l.b16 %v1827
    %v2133 = vunpack.c.h.b16 %v1827
    %v2134 = vunpack.c.l.b16 %v1828
    %v2135 = vunpack.c.h.b16 %v1828
    %v2136 = vunpack.c.l.b16 %v1829
    %v2137 = vunpack.c.h.b16 %v1829
    %v2138 = vunpack.c.l.b16 %v1830
    %v2139 = vunpack.c.h.b16 %v1830
    %v2140 = vunpack.c.l.b16 %v1831
    %v2141 = vunpack.c.h.b16 %v1831
    %v2142 = vunpack.c.l.b16 %v1832
    %v2143 = vunpack.c.h.b16 %v1832
    %v2144 = vunpack.c.l.b16 %v1833
    %v2145 = vunpack.c.h.b16 %v1833
    %v2146 = vunpack.c.l.b16 %v1834
    %v2147 = vunpack.c.h.b16 %v1834
    %v2148 = vunpack.c.l.b16 %v1835
    %v2149 = vunpack.c.h.b16 %v1835
    %v2150 = vunpack.c.l.b16 %v1836
    %v2151 = vunpack.c.h.b16 %v1836
    %v2152 = vunpack.c.l.b16 %v1837
    %v2153 = vunpack.c.h.b16 %v1837
    %v2154 = vunpack.c.l.b16 %v1838
    %v2155 = vunpack.c.h.b16 %v1838
    %v2156 = vunpack.c.l.b16 %v1839
    %v2157 = vunpack.c.h.b16 %v1839
    %v2158 = vunpack.c.l.b16 %v1840
    %v2159 = vunpack.c.h.b16 %v1840
    %v2160 = vunpack.c.l.b16 %v1841
    %v2161 = vunpack.c.h.b16 %v1841
    %v2162 = vunpack.c.l.b16 %v1842
    %v2163 = vunpack.c.h.b16 %v1842
    %v2164 = vunpack.c.l.b16 %v1843
    %v2165 = vunpack.c.h.b16 %v1843
    %v2166 = vunpack.c.l.b16 %v1844
    %v2167 = vunpack.c.h.b16 %v1844
    %v2168 = vunpack.c.l.b16 %v1845
    %v2169 = vunpack.c.h.b16 %v1845
    %v2170 = vunpack.c.l.b16 %v1846
    %v2171 = vunpack.c.h.b16 %v1846
    %v2172 = vunpack.c.l.b16 %v1847
    %v2173 = vunpack.c.h.b16 %v1847
    %v2174 = vunpack.c.l.b16 %v1848
    %v2175 = vunpack.c.h.b16 %v1848
    %v2176 = vunpack.c.l.b16 %v1849
    %v2177 = vunpack.c.h.b16 %v1849
    %v2178 = vunpack.c.l.b16 %v1850
    %v2179 = vunpack.c.h.b16 %v1850
    %v2180 = vunpack.c.l.b16 %v1851
    %v2181 = vunpack.c.h.b16 %v1851
    %v2182 = vunpack.c.l.b16 %v1852
    %v2183 = vunpack.c.h.b16 %v1852
    %v2184 = vunpack.c.l.b16 %v1853
    %v2185 = vunpack.c.h.b16 %v1853
    %v2186 = vunpack.c.l.b16 %v1854
    %v2187 = vunpack.c.h.b16 %v1854
    %v2188 = vunpack.c.l.b16 %v1855
    %v2189 = vunpack.c.h.b16 %v1855
    %v2190 = vunpack.c.l.b16 %v1856
    %v2191 = vunpack.c.h.b16 %v1856
    %v2192 = vunpack.c.l.b16 %v1857
    %v2193 = vunpack.c.h.b16 %v1857
    %v2194 = vunpack.c.l.b16 %v1858
    %v2195 = vunpack.c.h.b16 %v1858
    %v2196 = vunpack.c.l.b16 %v1859
    %v2197 = vunpack.c.h.b16 %v1859
    %v2198 = vunpack.c.l.b16 %v1860
    %v2199 = vunpack.c.h.b16 %v1860
    %v2200 = vunpack.c.l.b16 %v1861
    %v2201 = vunpack.c.h.b16 %v1861
    %v2202 = vunpack.c.l.b16 %v1862
    %v2203 = vunpack.c.h.b16 %v1862
    %v2204 = vunpack.c.l.b16 %v1863
    %v2205 = vunpack.c.h.b16 %v1863
    %v2206 = vunpack.c.l.b16 %v1864
    %v2207 = vunpack.c.h.b16 %v1864
    %v2208 = vunpack.c.l.b16 %v1865
    %v2209 = vunpack.c.h.b16 %v1865
    %v2210 = vunpack.c.l.b16 %v1866
    %v2211 = vunpack.c.h.b16 %v1866
    %v2212 = vunpack.c.l.b16 %v1867
    %v2213 = vunpack.c.h.b16 %v1867
    %v2214 = vunpack.c.l.b16 %v1868
    %v2215 = vunpack.c.h.b16 %v1868
    %v2216 = vunpack.c.l.b16 %v1869
    %v2217 = vunpack.c.h.b16 %v1869
    %v2218 = vunpack.c.l.b16 %v1870
    %v2219 = vunpack.c.h.b16 %v1870
    %v2220 = vunpack.c.l.b16 %v1871
    %v2221 = vunpack.c.h.b16 %v1871
    %v2222 = vunpack.c.l.b16 %v1872
    %v2223 = vunpack.c.h.b16 %v1872
    %v2224 = vunpack.c.l.b16 %v1873
    %v2225 = vunpack.c.h.b16 %v1873
    %v2226 = vunpack.c.l.b16 %v1874
    %v2227 = vunpack.c.h.b16 %v1874
    %v2228 = vunpack.c.l.b16 %v1875
    %v2229 = vunpack.c.h.b16 %v1875
    %v2230 = vunpack.c.l.b16 %v1876
    %v2231 = vunpack.c.h.b16 %v1876
    %v2232 = vunpack.c.l.b16 %v1877
    %v2233 = vunpack.c.h.b16 %v1877
    %v2234 = vunpack.c.l.b16 %v1878
    %v2235 = vunpack.c.h.b16 %v1878
    %v2236 = vunpack.c.l.b16 %v1879
    %v2237 = vunpack.c.h.b16 %v1879
    %v2238 = vunpack.c.l.b16 %v1880
    %v2239 = vunpack.c.h.b16 %v1880
    %v2240 = vunpack.c.l.b16 %v1881
    %v2241 = vunpack.c.h.b16 %v1881
    %v2242 = vunpack.c.l.b16 %v1882
    %v2243 = vunpack.c.h.b16 %v1882
    %v2244 = vunpack.c.l.b16 %v1883
    %v2245 = vunpack.c.h.b16 %v1883
    %v2246 = vunpack.c.l.b16 %v1884
    %v2247 = vunpack.c.h.b16 %v1884
    %v2248 = vunpack.c.l.b16 %v1885
    %v2249 = vunpack.c.h.b16 %v1885
    %v2250 = vunpack.c.l.b16 %v1886
    %v2251 = vunpack.c.h.b16 %v1886
    %v2252 = vunpack.c.l.b16 %v1887
    %v2253 = vunpack.c.h.b16 %v1887
    %v2254 = vunpack.c.l.b16 %v1888
    %v2255 = vunpack.c.h.b16 %v1888
    %v2256 = vunpack.c.l.b16 %v1889
    %v2257 = vunpack.c.h.b16 %v1889
    %v2258 = vunpack.c.l.b16 %v1890
    %v2259 = vunpack.c.h.b16 %v1890
    %v2260 = vunpack.c.l.b16 %v1891
    %v2261 = vunpack.c.h.b16 %v1891
    %v2262 = vunpack.c.l.b16 %v1892
    %v2263 = vunpack.c.h.b16 %v1892
    %v2264 = vunpack.c.l.b16 %v1893
    %v2265 = vunpack.c.h.b16 %v1893
    %v2266 = vunpack.c.l.b16 %v1894
    %v2267 = vunpack.c.h.b16 %v1894
    %v2268 = vunpack.c.l.b16 %v1895
    %v2269 = vunpack.c.h.b16 %v1895
    %v2270 = vunpack.c.l.b16 %v1896
    %v2271 = vunpack.c.h.b16 %v1896
    %v2272 = vunpack.c.l.b16 %v1897
    %v2273 = vunpack.c.h.b16 %v1897
    %v2274 = vunpack.c.l.b16 %v1898
    %v2275 = vunpack.c.h.b16 %v1898
    %v2276 = vunpack.c.l.b16 %v1899
    %v2277 = vunpack.c.h.b16 %v1899
    %v2278 = vunpack.c.l.b16 %v1900
    %v2279 = vunpack.c.h.b16 %v1900
    %v2280 = vunpack.c.l.b16 %v1901
    %v2281 = vunpack.c.h.b16 %v1901
    %v2282 = vunpack.c.l.b16 %v1902
    %v2283 = vunpack.c.h.b16 %v1902
    %v2284 = vunpack.c.l.b16 %v1903
    %v2285 = vunpack.c.h.b16 %v1903
    %v2286 = vunpack.c.l.b16 %v1904
    %v2287 = vunpack.c.h.b16 %v1904
    %v2288 = vunpack.c.l.b16 %v1905
    %v2289 = vunpack.c.h.b16 %v1905
    %v2290 = vunpack.c.l.b16 %v1906
    %v2291 = vunpack.c.h.b16 %v1906
    %v2292 = vunpack.c.l.b16 %v1907
    %v2293 = vunpack.c.h.b16 %v1907
    %v2294 = vunpack.c.l.b16 %v1908
    %v2295 = vunpack.c.h.b16 %v1908
    %v2296 = vunpack.c.l.b16 %v1909
    %v2297 = vunpack.c.h.b16 %v1909
    %v2298 = vunpack.c.l.b16 %v1910
    %v2299 = vunpack.c.h.b16 %v1910
    %v2300 = vunpack.c.l.b16 %v1911
    %v2301 = vunpack.c.h.b16 %v1911
    %v2302 = vunpack.c.l.b16 %v1912
    %v2303 = vunpack.c.h.b16 %v1912
    %v2304 = vunpack.c.l.b16 %v1913
    %v2305 = vunpack.c.h.b16 %v1913
    %v2306 = vunpack.c.l.b16 %v1914
    %v2307 = vunpack.c.h.b16 %v1914
    %v2308 = vunpack.c.l.b16 %v1915
    %v2309 = vunpack.c.h.b16 %v1915
    %v2310 = vunpack.c.l.b16 %v1916
    %v2311 = vunpack.c.h.b16 %v1916
    %v2312 = vunpack.c.l.b16 %v1917
    %v2313 = vunpack.c.h.b16 %v1917
    %v2314 = vunpack.c.l.b16 %v1918
    %v2315 = vunpack.c.h.b16 %v1918
    %v2316 = vunpack.c.l.b16 %v1919
    %v2317 = vunpack.c.h.b16 %v1919
    %v2318 = vunpack.c.l.b16 %v1920
    %v2319 = vunpack.c.h.b16 %v1920
    %v2320 = vunpack.c.l.b16 %v1921
    %v2321 = vunpack.c.h.b16 %v1921
    %v2322 = vunpack.c.l.b16 %v1922
    %v2323 = vunpack.c.h.b16 %v1922
    %v2324 = vunpack.c.l.b16 %v1923
    %v2325 = vunpack.c.h.b16 %v1923
    %v2326 = vunpack.c.l.b16 %v1924
    %v2327 = vunpack.c.h.b16 %v1924
    %v2328 = vunpack.c.l.b16 %v1925
    %v2329 = vunpack.c.h.b16 %v1925
    %v2330 = vunpack.c.l.b16 %v1926
    %v2331 = vunpack.c.h.b16 %v1926
    %v2332 = vunpack.c.l.b16 %v1927
    %v2333 = vunpack.c.h.b16 %v1927
    %v2334 = vpack.c.b16 %v2082, %v2078
    %v2335 = vpack.c.b16 %v2083, %v2079
    %v2336 = vpack.c.b16 %v2084, %v2080
    %v2337 = vpack.c.b16 %v2085, %v2081
    %v2338 = vpack.c.b16 %v2090, %v2086
    %v2339 = vpack.c.b16 %v2091, %v2087
    %v2340 = vpack.c.b16 %v2092, %v2088
    %v2341 = vpack.c.b16 %v2093, %v2089
    %v2342 = vpack.c.b16 %v2098, %v2094
    %v2343 = vpack.c.b16 %v2099, %v2095
    %v2344 = vpack.c.b16 %v2100, %v2096
    %v2345 = vpack.c.b16 %v2101, %v2097
    %v2346 = vpack.c.b16 %v2106, %v2102
    %v2347 = vpack.c.b16 %v2107, %v2103
    %v2348 = vpack.c.b16 %v2108, %v2104
    %v2349 = vpack.c.b16 %v2109, %v2105
    %v2350 = vpack.c.b16 %v2114, %v2110
    %v2351 = vpack.c.b16 %v2115, %v2111
    %v2352 = vpack.c.b16 %v2116, %v2112
    %v2353 = vpack.c.b16 %v2117, %v2113
    %v2354 = vpack.c.b16 %v2122, %v2118
    %v2355 = vpack.c.b16 %v2123, %v2119
    %v2356 = vpack.c.b16 %v2124, %v2120
    %v2357 = vpack.c.b16 %v2125, %v2121
    %v2358 = vpack.c.b16 %v2130, %v2126
    %v2359 = vpack.c.b16 %v2131, %v2127
    %v2360 = vpack.c.b16 %v2132, %v2128
    %v2361 = vpack.c.b16 %v2133, %v2129
    %v2362 = vpack.c.b16 %v2138, %v2134
    %v2363 = vpack.c.b16 %v2139, %v2135
    %v2364 = vpack.c.b16 %v2140, %v2136
    %v2365 = vpack.c.b16 %v2141, %v2137
    %v2366 = vpack.c.b16 %v2146, %v2142
    %v2367 = vpack.c.b16 %v2147, %v2143
    %v2368 = vpack.c.b16 %v2148, %v2144
    %v2369 = vpack.c.b16 %v2149, %v2145
    %v2370 = vpack.c.b16 %v2154, %v2150
    %v2371 = vpack.c.b16 %v2155, %v2151
    %v2372 = vpack.c.b16 %v2156, %v2152
    %v2373 = vpack.c.b16 %v2157, %v2153
    %v2374 = vpack.c.b16 %v2162, %v2158
    %v2375 = vpack.c.b16 %v2163, %v2159
    %v2376 = vpack.c.b16 %v2164, %v2160
    %v2377 = vpack.c.b16 %v2165, %v2161
    %v2378 = vpack.c.b16 %v2170, %v2166
    %v2379 = vpack.c.b16 %v2171, %v2167
    %v2380 = vpack.c.b16 %v2172, %v2168
    %v2381 = vpack.c.b16 %v2173, %v2169
    %v2382 = vpack.c.b16 %v2178, %v2174
    %v2383 = vpack.c.b16 %v2179, %v2175
    %v2384 = vpack.c.b16 %v2180, %v2176
    %v2385 = vpack.c.b16 %v2181, %v2177
    %v2386 = vpack.c.b16 %v2186, %v2182
    %v2387 = vpack.c.b16 %v2187, %v2183
    %v2388 = vpack.c.b16 %v2188, %v2184
    %v2389 = vpack.c.b16 %v2189, %v2185
    %v2390 = vpack.c.b16 %v2194, %v2190
    %v2391 = vpack.c.b16 %v2195, %v2191
    %v2392 = vpack.c.b16 %v2196, %v2192
    %v2393 = vpack.c.b16 %v2197, %v2193
    %v2394 = vpack.c.b16 %v2202, %v2198
    %v2395 = vpack.c.b16 %v2203, %v2199
    %v2396 = vpack.c.b16 %v2204, %v2200
    %v2397 = vpack.c.b16 %v2205, %v2201
    %v2398 = vpack.c.b16 %v2210, %v2206
    %v2399 = vpack.c.b16 %v2211, %v2207
    %v2400 = vpack.c.b16 %v2212, %v2208
    %v2401 = vpack.c.b16 %v2213, %v2209
    %v2402 = vpack.c.b16 %v2218, %v2214
    %v2403 = vpack.c.b16 %v2219, %v2215
    %v2404 = vpack.c.b16 %v2220, %v2216
    %v2405 = vpack.c.b16 %v2221, %v2217
    %v2406 = vpack.c.b16 %v2226, %v2222
    %v2407 = vpack.c.b16 %v2227, %v2223
    %v2408 = vpack.c.b16 %v2228, %v2224
    %v2409 = vpack.c.b16 %v2229, %v2225
    %v2410 = vpack.c.b16 %v2234, %v2230
    %v2411 = vpack.c.b16 %v2235, %v2231
    %v2412 = vpack.c.b16 %v2236, %v2232
    %v2413 = vpack.c.b16 %v2237, %v2233
    %v2414 = vpack.c.b16 %v2242, %v2238
    %v2415 = vpack.c.b16 %v2243, %v2239
    %v2416 = vpack.c.b16 %v2244, %v2240
    %v2417 = vpack.c.b16 %v2245, %v2241
    %v2418 = vpack.c.b16 %v2250, %v2246
    %v2419 = vpack.c.b16 %v2251, %v2247
    %v2420 = vpack.c.b16 %v2252, %v2248
    %v2421 = vpack.c.b16 %v2253, %v2249
    %v2422 = vpack.c.b16 %v2258, %v2254
    %v2423 = vpack.c.b16 %v2259, %v2255
    %v2424 = vpack.c.b16 %v2260, %v2256
    %v2425 = vpack.c.b16 %v2261, %v2257
    %v2426 = vpack.c.b16 %v2266, %v2262
    %v2427 = vpack.c.b16 %v2267, %v2263
    %v2428 = vpack.c.b16 %v2268, %v2264
    %v2429 = vpack.c.b16 %v2269, %v2265
    %v2430 = vpack.c.b16 %v2274, %v2270
    %v2431 = vpack.c.b16 %v2275, %v2271
    %v2432 = vpack.c.b16 %v2276, %v2272
    %v2433 = vpack.c.b16 %v2277, %v2273
    %v2434 = vpack.c.b16 %v2282, %v2278
    %v2435 = vpack.c.b16 %v2283, %v2279
    %v2436 = vpack.c.b16 %v2284, %v2280
    %v2437 = vpack.c.b16 %v2285, %v2281
    %v2438 = vpack.c.b16 %v2290, %v2286
    %v2439 = vpack.c.b16 %v2291, %v2287
    %v2440 = vpack.c.b16 %v2292, %v2288
    %v2441 = vpack.c.b16 %v2293, %v2289
    %v2442 = vpack.c.b16 %v2298, %v2294
    %v2443 = vpack.c.b16 %v2299, %v2295
    %v2444 = vpack.c.b16 %v2300, %v2296
    %v2445 = vpack.c.b16 %v2301, %v2297
    %v2446 = vpack.c.b16 %v2306, %v2302
    %v2447 = vpack.c.b16 %v2307, %v2303
    %v2448 = vpack.c.b16 %v2308, %v2304
    %v2449 = vpack.c.b16 %v2309, %v2305
    %v2450 = vpack.c.b16 %v2314, %v2310
    %v2451 = vpack.c.b16 %v2315, %v2311
    %v2452 = vpack.c.b16 %v2316, %v2312
    %v2453 = vpack.c.b16 %v2317, %v2313
    %v2454 = vpack.c.b16 %v2322, %v2318
    %v2455 = vpack.c.b16 %v2323, %v2319
    %v2456 = vpack.c.b16 %v2324, %v2320
    %v2457 = vpack.c.b16 %v2325, %v2321
    %v2458 = vpack.c.b16 %v2330, %v2326
    %v2459 = vpack.c.b16 %v2331, %v2327
    %v2460 = vpack.c.b16 %v2332, %v2328
    %v2461 = vpack.c.b16 %v2333, %v2329
    %2590 = vmatprep.subr.bf16.mxu0 %v2335
    %2591 = vmatpush1.bf16.msra.mxu0 %v2334
    %2592 = vmatprep.subr.bf16.mxu0 %v2339
    %2593 = vmatpush1.bf16.msra.mxu0 %v2338
    %2594 = vmatprep.subr.bf16.mxu0 %v2343
    %2595 = vmatpush1.bf16.msra.mxu0 %v2342
    %2596 = vmatprep.subr.bf16.mxu0 %v2347
    %2597 = vmatpush1.bf16.msra.mxu0 %v2346
    %2598 = vmatprep.subr.bf16.mxu0 %v2351
    %2599 = vmatpush1.bf16.msra.mxu0 %v2350
    %2600 = vmatprep.subr.bf16.mxu0 %v2355
    %2601 = vmatpush1.bf16.msra.mxu0 %v2354
    %2602 = vmatprep.subr.bf16.mxu0 %v2359
    %2603 = vmatpush1.bf16.msra.mxu0 %v2358
    %2604 = vmatprep.subr.bf16.mxu0 %v2363
    %2605 = vmatpush1.bf16.msra.mxu0 %v2362
    %2606 = vmatprep.subr.bf16.mxu0 %v2367
    %2607 = vmatpush1.bf16.msra.mxu0 %v2366
    %2608 = vmatprep.subr.bf16.mxu0 %v2371
    %2609 = vmatpush1.bf16.msra.mxu0 %v2370
    %2610 = vmatprep.subr.bf16.mxu0 %v2375
    %2611 = vmatpush1.bf16.msra.mxu0 %v2374
    %2612 = vmatprep.subr.bf16.mxu0 %v2379
    %2613 = vmatpush1.bf16.msra.mxu0 %v2378
    %2614 = vmatprep.subr.bf16.mxu0 %v2383
    %2615 = vmatpush1.bf16.msra.mxu0 %v2382
    %2616 = vmatprep.subr.bf16.mxu0 %v2387
    %2617 = vmatpush1.bf16.msra.mxu0 %v2386
    %2618 = vmatprep.subr.bf16.mxu0 %v2391
    %2619 = vmatpush1.bf16.msra.mxu0 %v2390
    %2620 = vmatprep.subr.bf16.mxu0 %v2395
    %2621 = vmatpush1.bf16.msra.mxu0 %v2394
    %2622 = vmatprep.mubr.bf16.mxu0 %v1797
    %2623 = vmatmul.mubr.bf16.gmra.mrb[0].mxu0 %v1796
    %v2624 = vpop.f32.mrb[0].mxu0
    %v2625 = vadd.f32 %v1933, %v2624
    %v2626 = vpop.f32.mrb[0].mxu0
    %v2627 = vadd.f32 %v1937, %v2626
    %v2628 = vpop.f32.mrb[0].mxu0
    %v2629 = vpop.f32.mrb[0].mxu0
    %2630 = vdwg.mxu0
    %2631 = vmatprep.subr.bf16.mxu0 %v2399
    %2632 = vmatpush1.bf16.msra.mxu0 %v2398
    %2633 = vmatprep.subr.bf16.mxu0 %v2403
    %2634 = vmatpush1.bf16.msra.mxu0 %v2402
    %2635 = vmatprep.subr.bf16.mxu0 %v2407
    %2636 = vmatpush1.bf16.msra.mxu0 %v2406
    %2637 = vmatprep.subr.bf16.mxu0 %v2411
    %2638 = vmatpush1.bf16.msra.mxu0 %v2410
    %2639 = vmatprep.subr.bf16.mxu0 %v2415
    %2640 = vmatpush1.bf16.msra.mxu0 %v2414
    %2641 = vmatprep.subr.bf16.mxu0 %v2419
    %2642 = vmatpush1.bf16.msra.mxu0 %v2418
    %2643 = vmatprep.subr.bf16.mxu0 %v2423
    %2644 = vmatpush1.bf16.msra.mxu0 %v2422
    %2645 = vmatprep.subr.bf16.mxu0 %v2427
    %2646 = vmatpush1.bf16.msra.mxu0 %v2426
    %2647 = vmatprep.subr.bf16.mxu0 %v2431
    %2648 = vmatpush1.bf16.msra.mxu0 %v2430
    %2649 = vmatprep.subr.bf16.mxu0 %v2435
    %2650 = vmatpush1.bf16.msra.mxu0 %v2434
    %2651 = vmatprep.subr.bf16.mxu0 %v2439
    %2652 = vmatpush1.bf16.msra.mxu0 %v2438
    %2653 = vmatprep.subr.bf16.mxu0 %v2443
    %2654 = vmatpush1.bf16.msra.mxu0 %v2442
    %2655 = vmatprep.subr.bf16.mxu0 %v2447
    %2656 = vmatpush1.bf16.msra.mxu0 %v2446
    %2657 = vmatprep.subr.bf16.mxu0 %v2451
    %2658 = vmatpush1.bf16.msra.mxu0 %v2450
    %2659 = vmatprep.subr.bf16.mxu0 %v2455
    %2660 = vmatpush1.bf16.msra.mxu0 %v2454
    %2661 = vmatprep.subr.bf16.mxu0 %v2459
    %2662 = vmatpush1.bf16.msra.mxu0 %v2458
    %2663 = vmatprep.mubr.bf16.mxu0 %v1799
    %2664 = vmatmul.mubr.bf16.gmra.mrb[0].mxu0 %v1798
    %v2665 = vpop.f32.mrb[0].mxu0
    %v2666 = vadd.f32 %v2625, %v2665
    %v2667 = vpop.f32.mrb[0].mxu0
    %v2668 = vadd.f32 %v2627, %v2667
    %v2669 = vpop.f32.mrb[0].mxu0
    %v2670 = vpop.f32.mrb[0].mxu0
    %2671 = vdwg.mxu0
    %2672 = vmatprep.subr.bf16.mxu0 %v2337
    %2673 = vmatpush1.bf16.msra.mxu0 %v2336
    %2674 = vmatprep.subr.bf16.mxu0 %v2341
    %2675 = vmatpush1.bf16.msra.mxu0 %v2340
    %2676 = vmatprep.subr.bf16.mxu0 %v2345
    %2677 = vmatpush1.bf16.msra.mxu0 %v2344
    %2678 = vmatprep.subr.bf16.mxu0 %v2349
    %2679 = vmatpush1.bf16.msra.mxu0 %v2348
    %2680 = vmatprep.subr.bf16.mxu0 %v2353
    %2681 = vmatpush1.bf16.msra.mxu0 %v2352
    %2682 = vmatprep.subr.bf16.mxu0 %v2357
    %2683 = vmatpush1.bf16.msra.mxu0 %v2356
    %2684 = vmatprep.subr.bf16.mxu0 %v2361
    %2685 = vmatpush1.bf16.msra.mxu0 %v2360
    %2686 = vmatprep.subr.bf16.mxu0 %v2365
    %2687 = vmatpush1.bf16.msra.mxu0 %v2364
    %2688 = vmatprep.subr.bf16.mxu0 %v2369
    %2689 = vmatpush1.bf16.msra.mxu0 %v2368
    %2690 = vmatprep.subr.bf16.mxu0 %v2373
    %2691 = vmatpush1.bf16.msra.mxu0 %v2372
    %2692 = vmatprep.subr.bf16.mxu0 %v2377
    %2693 = vmatpush1.bf16.msra.mxu0 %v2376
    %2694 = vmatprep.subr.bf16.mxu0 %v2381
    %2695 = vmatpush1.bf16.msra.mxu0 %v2380
    %2696 = vmatprep.subr.bf16.mxu0 %v2385
    %2697 = vmatpush1.bf16.msra.mxu0 %v2384
    %2698 = vmatprep.subr.bf16.mxu0 %v2389
    %2699 = vmatpush1.bf16.msra.mxu0 %v2388
    %2700 = vmatprep.subr.bf16.mxu0 %v2393
    %2701 = vmatpush1.bf16.msra.mxu0 %v2392
    %2702 = vmatprep.subr.bf16.mxu0 %v2397
    %2703 = vmatpush1.bf16.msra.mxu0 %v2396
    %2704 = vmatprep.mubr.bf16.mxu0 %v1797
    %2705 = vmatmul.mubr.bf16.gmra.mrb[0].mxu0 %v1796
    %v2706 = vpop.f32.mrb[0].mxu0
    %v2707 = vadd.f32 %v1941, %v2706
    %v2708 = vpop.f32.mrb[0].mxu0
    %v2709 = vadd.f32 %v1945, %v2708
    %v2710 = vpop.f32.mrb[0].mxu0
    %v2711 = vpop.f32.mrb[0].mxu0
    %2712 = vdwg.mxu0
    %2713 = vmatprep.subr.bf16.mxu0 %v2401
    %2714 = vmatpush1.bf16.msra.mxu0 %v2400
    %2715 = vmatprep.subr.bf16.mxu0 %v2405
    %2716 = vmatpush1.bf16.msra.mxu0 %v2404
    %2717 = vmatprep.subr.bf16.mxu0 %v2409
    %2718 = vmatpush1.bf16.msra.mxu0 %v2408
    %2719 = vmatprep.subr.bf16.mxu0 %v2413
    %2720 = vmatpush1.bf16.msra.mxu0 %v2412
    %2721 = vmatprep.subr.bf16.mxu0 %v2417
    %2722 = vmatpush1.bf16.msra.mxu0 %v2416
    %2723 = vmatprep.subr.bf16.mxu0 %v2421
    %2724 = vmatpush1.bf16.msra.mxu0 %v2420
    %2725 = vmatprep.subr.bf16.mxu0 %v2425
    %2726 = vmatpush1.bf16.msra.mxu0 %v2424
    %2727 = vmatprep.subr.bf16.mxu0 %v2429
    %2728 = vmatpush1.bf16.msra.mxu0 %v2428
    %2729 = vmatprep.subr.bf16.mxu0 %v2433
    %2730 = vmatpush1.bf16.msra.mxu0 %v2432
    %2731 = vmatprep.subr.bf16.mxu0 %v2437
    %2732 = vmatpush1.bf16.msra.mxu0 %v2436
    %2733 = vmatprep.subr.bf16.mxu0 %v2441
    %2734 = vmatpush1.bf16.msra.mxu0 %v2440
    %2735 = vmatprep.subr.bf16.mxu0 %v2445
    %2736 = vmatpush1.bf16.msra.mxu0 %v2444
    %2737 = vmatprep.subr.bf16.mxu0 %v2449
    %2738 = vmatpush1.bf16.msra.mxu0 %v2448
    %2739 = vmatprep.subr.bf16.mxu0 %v2453
    %2740 = vmatpush1.bf16.msra.mxu0 %v2452
    %2741 = vmatprep.subr.bf16.mxu0 %v2457
    %2742 = vmatpush1.bf16.msra.mxu0 %v2456
    %2743 = vmatprep.subr.bf16.mxu0 %v2461
    %2744 = vmatpush1.bf16.msra.mxu0 %v2460
    %2745 = vmatprep.mubr.bf16.mxu0 %v1799
    %2746 = vmatmul.mubr.bf16.gmra.mrb[0].mxu0 %v1798
    %v2747 = vpop.f32.mrb[0].mxu0
    %v2748 = vadd.f32 %v2707, %v2747
    %v2749 = vpop.f32.mrb[0].mxu0
    %v2750 = vadd.f32 %v2709, %v2749
    %v2751 = vpop.f32.mrb[0].mxu0
    %v2752 = vpop.f32.mrb[0].mxu0
    %2753 = vdwg.mxu0
    %v2754 = vmax.f32 %v2666, 0.0
    %v2755 = vmax.f32 %v2668, 0.0
    %v2756 = vmax.f32 %v2748, 0.0
    %v2757 = vmax.f32 %v2750, 0.0
    %2758 = vst [vmem:[#allocation11] sm:$0xff] %v2754
    %2759 = vst [vmem:[#allocation11 + $0x8] sm:$0xff] %v2755
    %2760 = vst [vmem:[#allocation11 + $0x10] sm:$0xff] %v2756
    %2761 = vst [vmem:[#allocation11 + $0x18] sm:$0xff] %v2757
    %v2762 = vpack.c.bf16 %v2754, %v2754
    %v2763 = vpack.c.bf16 %v2755, %v2755
    %v2764 = vpack.c.bf16 %v2756, %v2756
    %v2765 = vpack.c.bf16 %v2757, %v2757
    %v2766 = vld [vmem:[#allocation8] sm:$0xf]
    %v2767 = vld [vmem:[#allocation8 + $0x4] sm:$0xf]
    %v2768 = vld [vmem:[#allocation8 + $0x8] sm:$0xf]
    %v2769 = vld [vmem:[#allocation8 + $0xc] sm:$0xf]
    %v2770 = vld [vmem:[#allocation8 + $0x10] sm:$0xf]
    %v2771 = vld [vmem:[#allocation8 + $0x14] sm:$0xf]
    %v2772 = vld [vmem:[#allocation8 + $0x18] sm:$0xf]
    %v2773 = vld [vmem:[#allocation8 + $0x1c] sm:$0xf]
    %v2774 = vld [vmem:[#allocation8 + $0x20] sm:$0xf]
    %v2775 = vld [vmem:[#allocation8 + $0x24] sm:$0xf]
    %v2776 = vld [vmem:[#allocation8 + $0x28] sm:$0xf]
    %v2777 = vld [vmem:[#allocation8 + $0x2c] sm:$0xf]
    %v2778 = vld [vmem:[#allocation8 + $0x30] sm:$0xf]
    %v2779 = vld [vmem:[#allocation8 + $0x34] sm:$0xf]
    %v2780 = vld [vmem:[#allocation8 + $0x38] sm:$0xf]
    %v2781 = vld [vmem:[#allocation8 + $0x3c] sm:$0xf]
    %v2782 = vld [vmem:[#allocation8 + $0x40] sm:$0xf]
    %v2783 = vld [vmem:[#allocation8 + $0x44] sm:$0xf]
    %v2784 = vld [vmem:[#allocation8 + $0x48] sm:$0xf]
    %v2785 = vld [vmem:[#allocation8 + $0x4c] sm:$0xf]
    %v2786 = vld [vmem:[#allocation8 + $0x50] sm:$0xf]
    %v2787 = vld [vmem:[#allocation8 + $0x54] sm:$0xf]
    %v2788 = vld [vmem:[#allocation8 + $0x58] sm:$0xf]
    %v2789 = vld [vmem:[#allocation8 + $0x5c] sm:$0xf]
    %v2790 = vld [vmem:[#allocation8 + $0x60] sm:$0xf]
    %v2791 = vld [vmem:[#allocation8 + $0x64] sm:$0xf]
    %v2792 = vld [vmem:[#allocation8 + $0x68] sm:$0xf]
    %v2793 = vld [vmem:[#allocation8 + $0x6c] sm:$0xf]
    %v2794 = vld [vmem:[#allocation8 + $0x70] sm:$0xf]
    %v2795 = vld [vmem:[#allocation8 + $0x74] sm:$0xf]
    %v2796 = vld [vmem:[#allocation8 + $0x78] sm:$0xf]
    %v2797 = vld [vmem:[#allocation8 + $0x7c] sm:$0xf]
    %v2798 = vld [vmem:[#allocation8 + $0x80] sm:$0xf]
    %v2799 = vld [vmem:[#allocation8 + $0x84] sm:$0xf]
    %v2800 = vld [vmem:[#allocation8 + $0x88] sm:$0xf]
    %v2801 = vld [vmem:[#allocation8 + $0x8c] sm:$0xf]
    %v2802 = vld [vmem:[#allocation8 + $0x90] sm:$0xf]
    %v2803 = vld [vmem:[#allocation8 + $0x94] sm:$0xf]
    %v2804 = vld [vmem:[#allocation8 + $0x98] sm:$0xf]
    %v2805 = vld [vmem:[#allocation8 + $0x9c] sm:$0xf]
    %v2806 = vld [vmem:[#allocation8 + $0xa0] sm:$0xf]
    %v2807 = vld [vmem:[#allocation8 + $0xa4] sm:$0xf]
    %v2808 = vld [vmem:[#allocation8 + $0xa8] sm:$0xf]
    %v2809 = vld [vmem:[#allocation8 + $0xac] sm:$0xf]
    %v2810 = vld [vmem:[#allocation8 + $0xb0] sm:$0xf]
    %v2811 = vld [vmem:[#allocation8 + $0xb4] sm:$0xf]
    %v2812 = vld [vmem:[#allocation8 + $0xb8] sm:$0xf]
    %v2813 = vld [vmem:[#allocation8 + $0xbc] sm:$0xf]
    %v2814 = vld [vmem:[#allocation8 + $0xc0] sm:$0xf]
    %v2815 = vld [vmem:[#allocation8 + $0xc4] sm:$0xf]
    %v2816 = vld [vmem:[#allocation8 + $0xc8] sm:$0xf]
    %v2817 = vld [vmem:[#allocation8 + $0xcc] sm:$0xf]
    %v2818 = vld [vmem:[#allocation8 + $0xd0] sm:$0xf]
    %v2819 = vld [vmem:[#allocation8 + $0xd4] sm:$0xf]
    %v2820 = vld [vmem:[#allocation8 + $0xd8] sm:$0xf]
    %v2821 = vld [vmem:[#allocation8 + $0xdc] sm:$0xf]
    %v2822 = vld [vmem:[#allocation8 + $0xe0] sm:$0xf]
    %v2823 = vld [vmem:[#allocation8 + $0xe4] sm:$0xf]
    %v2824 = vld [vmem:[#allocation8 + $0xe8] sm:$0xf]
    %v2825 = vld [vmem:[#allocation8 + $0xec] sm:$0xf]
    %v2826 = vld [vmem:[#allocation8 + $0xf0] sm:$0xf]
    %v2827 = vld [vmem:[#allocation8 + $0xf4] sm:$0xf]
    %v2828 = vld [vmem:[#allocation8 + $0xf8] sm:$0xf]
    %v2829 = vld [vmem:[#allocation8 + $0xfc] sm:$0xf]
    %v2830 = vld [vmem:[%s6] sm:$0x1]
    %v2832 = vlaneseq
    %v2833 = vshrl.u32 %v2832, 7
    %v2834 = vsub.s32 0, %v2833
    %v2835 = vrot.slane %v2830, %v2834
    %v2901 = vunpack.c.l.b16 %v2766
    %v2902 = vunpack.c.l.b16 %v2767
    %v2903 = vunpack.c.l.b16 %v2768
    %v2904 = vunpack.c.l.b16 %v2769
    %v2905 = vunpack.c.l.b16 %v2770
    %v2906 = vunpack.c.l.b16 %v2771
    %v2907 = vunpack.c.l.b16 %v2772
    %v2908 = vunpack.c.l.b16 %v2773
    %v2909 = vunpack.c.l.b16 %v2774
    %v2910 = vunpack.c.l.b16 %v2775
    %v2911 = vunpack.c.l.b16 %v2776
    %v2912 = vunpack.c.l.b16 %v2777
    %v2913 = vunpack.c.l.b16 %v2778
    %v2914 = vunpack.c.l.b16 %v2779
    %v2915 = vunpack.c.l.b16 %v2780
    %v2916 = vunpack.c.l.b16 %v2781
    %v2917 = vunpack.c.l.b16 %v2782
    %v2918 = vunpack.c.l.b16 %v2783
    %v2919 = vunpack.c.l.b16 %v2784
    %v2920 = vunpack.c.l.b16 %v2785
    %v2921 = vunpack.c.l.b16 %v2786
    %v2922 = vunpack.c.l.b16 %v2787
    %v2923 = vunpack.c.l.b16 %v2788
    %v2924 = vunpack.c.l.b16 %v2789
    %v2925 = vunpack.c.l.b16 %v2790
    %v2926 = vunpack.c.l.b16 %v2791
    %v2927 = vunpack.c.l.b16 %v2792
    %v2928 = vunpack.c.l.b16 %v2793
    %v2929 = vunpack.c.l.b16 %v2794
    %v2930 = vunpack.c.l.b16 %v2795
    %v2931 = vunpack.c.l.b16 %v2796
    %v2932 = vunpack.c.l.b16 %v2797
    %v2933 = vunpack.c.l.b16 %v2798
    %v2934 = vunpack.c.l.b16 %v2799
    %v2935 = vunpack.c.l.b16 %v2800
    %v2936 = vunpack.c.l.b16 %v2801
    %v2937 = vunpack.c.l.b16 %v2802
    %v2938 = vunpack.c.l.b16 %v2803
    %v2939 = vunpack.c.l.b16 %v2804
    %v2940 = vunpack.c.l.b16 %v2805
    %v2941 = vunpack.c.l.b16 %v2806
    %v2942 = vunpack.c.l.b16 %v2807
    %v2943 = vunpack.c.l.b16 %v2808
    %v2944 = vunpack.c.l.b16 %v2809
    %v2945 = vunpack.c.l.b16 %v2810
    %v2946 = vunpack.c.l.b16 %v2811
    %v2947 = vunpack.c.l.b16 %v2812
    %v2948 = vunpack.c.l.b16 %v2813
    %v2949 = vunpack.c.l.b16 %v2814
    %v2950 = vunpack.c.l.b16 %v2815
    %v2951 = vunpack.c.l.b16 %v2816
    %v2952 = vunpack.c.l.b16 %v2817
    %v2953 = vunpack.c.l.b16 %v2818
    %v2954 = vunpack.c.l.b16 %v2819
    %v2955 = vunpack.c.l.b16 %v2820
    %v2956 = vunpack.c.l.b16 %v2821
    %v2957 = vunpack.c.l.b16 %v2822
    %v2958 = vunpack.c.l.b16 %v2823
    %v2959 = vunpack.c.l.b16 %v2824
    %v2960 = vunpack.c.l.b16 %v2825
    %v2961 = vunpack.c.l.b16 %v2826
    %v2962 = vunpack.c.l.b16 %v2827
    %v2963 = vunpack.c.l.b16 %v2828
    %v2964 = vunpack.c.l.b16 %v2829
    %v2965 = vpack.c.b16 %v2902, %v2901
    %v2966 = vpack.c.b16 %v2904, %v2903
    %v2967 = vpack.c.b16 %v2906, %v2905
    %v2968 = vpack.c.b16 %v2908, %v2907
    %v2969 = vpack.c.b16 %v2910, %v2909
    %v2970 = vpack.c.b16 %v2912, %v2911
    %v2971 = vpack.c.b16 %v2914, %v2913
    %v2972 = vpack.c.b16 %v2916, %v2915
    %v2973 = vpack.c.b16 %v2918, %v2917
    %v2974 = vpack.c.b16 %v2920, %v2919
    %v2975 = vpack.c.b16 %v2922, %v2921
    %v2976 = vpack.c.b16 %v2924, %v2923
    %v2977 = vpack.c.b16 %v2926, %v2925
    %v2978 = vpack.c.b16 %v2928, %v2927
    %v2979 = vpack.c.b16 %v2930, %v2929
    %v2980 = vpack.c.b16 %v2932, %v2931
    %v2981 = vpack.c.b16 %v2934, %v2933
    %v2982 = vpack.c.b16 %v2936, %v2935
    %v2983 = vpack.c.b16 %v2938, %v2937
    %v2984 = vpack.c.b16 %v2940, %v2939
    %v2985 = vpack.c.b16 %v2942, %v2941
    %v2986 = vpack.c.b16 %v2944, %v2943
    %v2987 = vpack.c.b16 %v2946, %v2945
    %v2988 = vpack.c.b16 %v2948, %v2947
    %v2989 = vpack.c.b16 %v2950, %v2949
    %v2990 = vpack.c.b16 %v2952, %v2951
    %v2991 = vpack.c.b16 %v2954, %v2953
    %v2992 = vpack.c.b16 %v2956, %v2955
    %v2993 = vpack.c.b16 %v2958, %v2957
    %v2994 = vpack.c.b16 %v2960, %v2959
    %v2995 = vpack.c.b16 %v2962, %v2961
    %v2996 = vpack.c.b16 %v2964, %v2963
    %3029 = vmatprep.subr.bf16.mxu0 0
    %3030 = vmatpush1.bf16.msra.mxu0 %v2965
    %3031 = vmatprep.subr.bf16.mxu0 0
    %3032 = vmatpush1.bf16.msra.mxu0 %v2966
    %3033 = vmatprep.subr.bf16.mxu0 0
    %3034 = vmatpush1.bf16.msra.mxu0 %v2967
    %3035 = vmatprep.subr.bf16.mxu0 0
    %3036 = vmatpush1.bf16.msra.mxu0 %v2968
    %3037 = vmatprep.subr.bf16.mxu0 0
    %3038 = vmatpush1.bf16.msra.mxu0 %v2969
    %3039 = vmatprep.subr.bf16.mxu0 0
    %3040 = vmatpush1.bf16.msra.mxu0 %v2970
    %3041 = vmatprep.subr.bf16.mxu0 0
    %3042 = vmatpush1.bf16.msra.mxu0 %v2971
    %3043 = vmatprep.subr.bf16.mxu0 0
    %3044 = vmatpush1.bf16.msra.mxu0 %v2972
    %3045 = vmatprep.subr.bf16.mxu0 0
    %3046 = vmatpush1.bf16.msra.mxu0 %v2973
    %3047 = vmatprep.subr.bf16.mxu0 0
    %3048 = vmatpush1.bf16.msra.mxu0 %v2974
    %3049 = vmatprep.subr.bf16.mxu0 0
    %3050 = vmatpush1.bf16.msra.mxu0 %v2975
    %3051 = vmatprep.subr.bf16.mxu0 0
    %3052 = vmatpush1.bf16.msra.mxu0 %v2976
    %3053 = vmatprep.subr.bf16.mxu0 0
    %3054 = vmatpush1.bf16.msra.mxu0 %v2977
    %3055 = vmatprep.subr.bf16.mxu0 0
    %3056 = vmatpush1.bf16.msra.mxu0 %v2978
    %3057 = vmatprep.subr.bf16.mxu0 0
    %3058 = vmatpush1.bf16.msra.mxu0 %v2979
    %3059 = vmatprep.subr.bf16.mxu0 0
    %3060 = vmatpush1.bf16.msra.mxu0 %v2980
    %3061 = vmatprep.mubr.bf16.mxu0 %v2763
    %3062 = vmatmul.mubr.bf16.gmra.mrb[0].mxu0 %v2762
    %v3063 = vpop.f32.mrb[0].mxu0
    %v3064 = vadd.f32 %v2835, %v3063
    %v3065 = vpop.f32.mrb[0].mxu0
    %v3066 = vpop.f32.mrb[0].mxu0
    %v3067 = vpop.f32.mrb[0].mxu0
    %3068 = vdwg.mxu0
    %3069 = vmatprep.subr.bf16.mxu0 0
    %3070 = vmatpush1.bf16.msra.mxu0 %v2981
    %3071 = vmatprep.subr.bf16.mxu0 0
    %3072 = vmatpush1.bf16.msra.mxu0 %v2982
    %3073 = vmatprep.subr.bf16.mxu0 0
    %3074 = vmatpush1.bf16.msra.mxu0 %v2983
    %3075 = vmatprep.subr.bf16.mxu0 0
    %3076 = vmatpush1.bf16.msra.mxu0 %v2984
    %3077 = vmatprep.subr.bf16.mxu0 0
    %3078 = vmatpush1.bf16.msra.mxu0 %v2985
    %3079 = vmatprep.subr.bf16.mxu0 0
    %3080 = vmatpush1.bf16.msra.mxu0 %v2986
    %3081 = vmatprep.subr.bf16.mxu0 0
    %3082 = vmatpush1.bf16.msra.mxu0 %v2987
    %3083 = vmatprep.subr.bf16.mxu0 0
    %3084 = vmatpush1.bf16.msra.mxu0 %v2988
    %3085 = vmatprep.subr.bf16.mxu0 0
    %3086 = vmatpush1.bf16.msra.mxu0 %v2989
    %3087 = vmatprep.subr.bf16.mxu0 0
    %3088 = vmatpush1.bf16.msra.mxu0 %v2990
    %3089 = vmatprep.subr.bf16.mxu0 0
    %3090 = vmatpush1.bf16.msra.mxu0 %v2991
    %3091 = vmatprep.subr.bf16.mxu0 0
    %3092 = vmatpush1.bf16.msra.mxu0 %v2992
    %3093 = vmatprep.subr.bf16.mxu0 0
    %3094 = vmatpush1.bf16.msra.mxu0 %v2993
    %3095 = vmatprep.subr.bf16.mxu0 0
    %3096 = vmatpush1.bf16.msra.mxu0 %v2994
    %3097 = vmatprep.subr.bf16.mxu0 0
    %3098 = vmatpush1.bf16.msra.mxu0 %v2995
    %3099 = vmatprep.subr.bf16.mxu0 0
    %3100 = vmatpush1.bf16.msra.mxu0 %v2996
    %3101 = vmatprep.mubr.bf16.mxu0 %v2765
    %3102 = vmatmul.mubr.bf16.gmra.mrb[0].mxu0 %v2764
    %v3103 = vpop.f32.mrb[0].mxu0
    %v3104 = vadd.f32 %v3064, %v3103
    %v3105 = vpop.f32.mrb[0].mxu0
    %v3106 = vpop.f32.mrb[0].mxu0
    %v3107 = vpop.f32.mrb[0].mxu0
    %3108 = vdwg.mxu0
    %3109 = vst [vmem:[#allocation10] sm:$0xff] %v3104
    // Predicated region
    $region46: #{tpu_custom_call.1} parent=1 // pred_check
      _
    $region47: #{tpu_custom_call.1} parent=1 // pred_check_branch
      %3111 = sbr.rel (0) target = $region49
    $region48: #{tpu_custom_call.1} parent=1 // pred_region
      %s3113 = ssub.s32 128, 128
      %3114 = vsyncadd [#allocation4], %s3113
      %s3116 = sshll.u32 [#allocation10], 4
      %s3117 = int_to_ptr.vmem [resolvable:$true] %s3116
      %3119 = dma.vmem_to_hbm [thread:$0]  %s3117, 128, %s7, [#allocation4]
    $region49: #{tpu_custom_call.1} parent=1 // pred_fallthru
      _
    // Predicated region
    $region50: #{tpu_custom_call.1} parent=1 // pred_check
      _
    $region51: #{tpu_custom_call.1} parent=1 // pred_check_branch
      %3121 = sbr.rel (0) target = $region53
    $region52: #{tpu_custom_call.1} parent=1 // pred_region
      %s3123 = ssub.s32 512, 512
      %3124 = vsyncadd [#allocation12], %s3123
      %s3126 = sshll.u32 [#allocation11], 4
      %s3127 = int_to_ptr.vmem [resolvable:$true] %s3126
      %3129 = dma.vmem_to_hbm [thread:$0]  %s3127, 512, %s8, [#allocation12]
    $region53: #{tpu_custom_call.1} parent=1 // pred_fallthru
      _
    // Predicated region
    $region54: #{tpu_custom_call.1} parent=1 // pred_check
      _
    $region55: #{tpu_custom_call.1} parent=1 // pred_check_branch
      %3131 = sbr.rel (0) target = $region57
    $region56: #{tpu_custom_call.1} parent=1 // pred_region
      %3132 = dma.done [#allocation4], 128
    $region57: #{tpu_custom_call.1} parent=1 // pred_fallthru
      _
    // Predicated region
    $region58: #{tpu_custom_call.1} parent=1 // pred_check
      _
    $region59: #{tpu_custom_call.1} parent=1 // pred_check_branch
      %3134 = sbr.rel (0) target = $region61
    $region60: #{tpu_custom_call.1} parent=1 // pred_region
      %3135 = dma.done [#allocation12], 512
    $region61: #{tpu_custom_call.1} parent=1 // pred_fallthru
      _
    %3136 = vsyncpa [#allocation3], 1
    %3137 = vsyncpa [#allocation6], 1
    %3138 = vsyncpa [#allocation9], 1
    %3139 = vsyncpa [#allocation4], 1
    %3140 = vsyncpa [#allocation12], 1

</llo_original>
